<compile_context>
chip_gen: v7x
topology: tpu7x:2x2x1
jax: 0.10.0
libtpu: 0.0.40
codegen_flags: <defaults>
</compile_context>

<pallas_src>
import functools

import jax
import jax.numpy as jnp
from jax import lax
from jax.experimental import pallas as pl
from jax.experimental.pallas import tpu as pltpu


def _residual_attention_kernel(x_ref, wqkv_ref, wo_ref, b_ref, o_ref,
                               concat_ref, *, batch, seq, heads, dim_head,
                               compute_dtype):
    # x_ref     : (B*N, D)      f32   (batch folded into sublanes)
    # wqkv_ref  : (D, 3*H*dh)   bf16  (softmax scale pre-folded into q cols)
    # wo_ref    : (H*dh, D)     bf16
    # b_ref     : (1, D)        f32
    # o_ref     : (B*N, D)
    # concat_ref: (B*N, H*dh)   f32 VMEM scratch for merged head outputs
    inner = heads * dim_head

    x = x_ref[...]                                   # (B*N, D) f32, residual
    xc = x.astype(compute_dtype)

    # One merged, lane-dense QKV projection over the whole (B*N, D) slab.
    qkv = jnp.dot(xc, wqkv_ref[...],
                  preferred_element_type=jnp.float32)        # (B*N, 3*inner)

    # Per-(batch, head) attention; B*H = 8 tiny iterations -> static unroll.
    for b in range(batch):
        r0, r1 = b * seq, (b + 1) * seq
        for h in range(heads):
            c0 = h * dim_head
            q = qkv[r0:r1, c0:c0 + dim_head]                         # (N, dh)
            k = qkv[r0:r1, inner + c0:inner + c0 + dim_head]         # (N, dh)
            v = qkv[r0:r1, 2 * inner + c0:2 * inner + c0 + dim_head]

            # q @ k^T without an explicit transpose (contract over dim_head).
            dots = lax.dot_general(
                q.astype(compute_dtype), k.astype(compute_dtype),
                dimension_numbers=(((1,), (1,)), ((), ())),
                preferred_element_type=jnp.float32)                  # (N, N)

            # Numerically-stable softmax in f32 (v5e has no bf16 VPU/EUP),
            # with normalization deferred past the @v matmul.
            dots = dots - jnp.max(dots, axis=-1, keepdims=True)
            e = jnp.exp(dots)
            inv = pl.reciprocal(jnp.sum(e, axis=-1, keepdims=True),
                                approx=True)                         # (N, 1)

            head_out = jnp.dot(e.astype(compute_dtype),
                               v.astype(compute_dtype),
                               preferred_element_type=jnp.float32) * inv
            concat_ref[r0:r1, c0:c0 + dim_head] = head_out           # (N, dh)

    # Single merged output projection across all heads & batches (K = H*dh).
    proj = jnp.dot(concat_ref[...].astype(compute_dtype), wo_ref[...],
                   preferred_element_type=jnp.float32)               # (B*N, D)

    # Bias + residual add (Residual_1: fn(x) + x); Dropout(0.0) == identity.
    o_ref[...] = (proj + b_ref[...] + x).astype(o_ref.dtype)


def residual_attention_forward(x, w_qkv, w_out, b_out, *, heads, dim_head,
                               scale, compute_dtype=jnp.bfloat16):
    """x: (B, N, D); w_qkv: (D, 3*h*dh); w_out: (h*dh, D); b_out: (1, D)."""
    B, N, D = x.shape
    inner = heads * dim_head

    # Fold the softmax scale into the q-columns of the merged QKV weight on
    # the wrapper side (fuses into the cast the wrapper already performs).
    col_scale = jnp.concatenate(
        [jnp.full((inner,), scale, dtype=w_qkv.dtype),
         jnp.ones((2 * inner,), dtype=w_qkv.dtype)])
    w_qkv_c = (w_qkv * col_scale[None, :]).astype(compute_dtype)   # (D, 3*inner)
    w_out_c = w_out.astype(compute_dtype)                          # (inner, D)
    b_out_f = b_out.astype(jnp.float32)                            # (1, D)

    # Fold batch into the sublane dim; no reshapes inside the kernel.
    x_flat = x.reshape(B * N, D)

    kernel = functools.partial(_residual_attention_kernel,
                               batch=B, seq=N, heads=heads,
                               dim_head=dim_head, compute_dtype=compute_dtype)

    out_flat = pl.pallas_call(
        kernel,
        out_shape=jax.ShapeDtypeStruct((B * N, D), x.dtype),
        grid_spec=pltpu.PrefetchScalarGridSpec(
            num_scalar_prefetch=0,
            grid=(1,),                     # whole (tiny) problem in one step
            in_specs=[
                pl.BlockSpec((B * N, D), lambda i: (0, 0)),
                pl.BlockSpec((D, 3 * inner), lambda i: (0, 0)),
                pl.BlockSpec((inner, D), lambda i: (0, 0)),
                pl.BlockSpec((1, D), lambda i: (0, 0)),
            ],
            out_specs=pl.BlockSpec((B * N, D), lambda i: (0, 0)),
            scratch_shapes=[pltpu.VMEM((B * N, inner), jnp.float32)],
        ),
        compiler_params=pltpu.CompilerParams(
            dimension_semantics=("arbitrary",),
            # Explicit VMEM budget so the same plan stays within v7x's
            # smaller (64 MiB physical) VMEM; trivially satisfied here.
            vmem_limit_bytes=32 * 1024 * 1024,
        ),
    )(x_flat, w_qkv_c, w_out_c, b_out_f)

    return out_flat.reshape(B, N, D)


def residual_attention_reference(x, w_qkv, w_out, b_out, *, heads, dim_head,
                                 scale):
    """Pure-JAX f32 reference mirroring Residual_1(Attention)."""
    B, N, D = x.shape
    inner = heads * dim_head
    qkv = x @ w_qkv                                        # (B, N, 3*inner)
    q, k, v = jnp.split(qkv, 3, axis=-1)

    def to_heads(t):  # 'b n (h d) -> b h n d'
        return t.reshape(B, N, heads, dim_head).transpose(0, 2, 1, 3)

    q, k, v = map(to_heads, (q, k, v))
    dots = jnp.einsum('bhid,bhjd->bhij', q, k) * scale
    attn = jax.nn.softmax(dots, axis=-1)
    out = jnp.einsum('bhij,bhjd->bhid', attn, v)
    out = out.transpose(0, 2, 1, 3).reshape(B, N, inner)   # 'b h n d -> b n (h d)'
    return out @ w_out + b_out + x                         # Residual: fn(x) + x


if __name__ == "__main__":
    # Small shapes consistent with the module.
    B, N, DIM = 2, 8, 32
    HEADS, DIM_HEAD = 4, 16
    INNER = HEADS * DIM_HEAD
    SCALE = DIM ** (-0.5)          # module uses dim**-0.5 (not dim_head**-0.5)

    key = jax.random.PRNGKey(0)
    kx, kq, kw, kb = jax.random.split(key, 4)

    x = jax.random.normal(kx, (B, N, DIM), dtype=jnp.float32)
    # Deterministic "Linear" params, stored pre-transposed so y = x @ W.
    w_qkv = jax.random.normal(kq, (DIM, 3 * INNER), dtype=jnp.float32) * 0.05
    w_out = jax.random.normal(kw, (INNER, DIM), dtype=jnp.float32) * 0.05
    b_out = jax.random.normal(kb, (1, DIM), dtype=jnp.float32) * 0.01

    out = residual_attention_forward(x, w_qkv, w_out, b_out,
                                     heads=HEADS, dim_head=DIM_HEAD,
                                     scale=SCALE)
    out = jax.block_until_ready(out)

    ref = residual_attention_reference(x, w_qkv, w_out, b_out,
                                       heads=HEADS, dim_head=DIM_HEAD,
                                       scale=SCALE)
    assert out.shape == (B, N, DIM)
    # bf16 MXU operands + approx reciprocal -> loosened tolerance vs f32 ref.
    assert jnp.allclose(out, ref, atol=2e-2, rtol=2e-2), "mismatch vs reference"

    print("KERNEL_OK")
</pallas_src>

<mosaic_0001>
module attributes {stable_mosaic.version = 11 : i64} {
  func.func @_residual_attention_kernel(%arg0: i32, %arg1: memref<16x32xf32, #tpu.memory_space<vmem>>, %arg2: memref<32x192xbf16, #tpu.memory_space<vmem>>, %arg3: memref<64x32xbf16, #tpu.memory_space<vmem>>, %arg4: memref<1x32xf32, #tpu.memory_space<vmem>>, %arg5: memref<16x32xf32, #tpu.memory_space<vmem>>, %arg6: memref<16x64xf32, #tpu.memory_space<vmem>>) attributes {dimension_semantics = [#tpu.dimension_semantics<arbitrary>], iteration_bounds = array<i64: 1>, scalar_prefetch = 0 : i64, scratch_operands = 1 : i64, tpu.core_type = #tpu.core_type<tc>, window_params = [{pipeline_mode = #tpu.pipeline_mode<synchronous>, transform_indices = @transform_0, window_bounds = array<i64: 16, 32>}, {pipeline_mode = #tpu.pipeline_mode<synchronous>, transform_indices = @transform_1, window_bounds = array<i64: 32, 192>}, {pipeline_mode = #tpu.pipeline_mode<synchronous>, transform_indices = @transform_2, window_bounds = array<i64: 64, 32>}, {pipeline_mode = #tpu.pipeline_mode<synchronous>, transform_indices = @transform_3, window_bounds = array<i64: 1, 32>}, {pipeline_mode = #tpu.pipeline_mode<synchronous>, transform_indices = @transform_4, window_bounds = array<i64: 16, 32>}]} {
    %c0 = arith.constant 0 : index
    %c0_0 = arith.constant 0 : index
    %0 = vector.load %arg1[%c0, %c0_0] : memref<16x32xf32, #tpu.memory_space<vmem>>, vector<16x32xf32>
    %1 = arith.truncf %0 : vector<16x32xf32> to vector<16x32xbf16>
    %c0_1 = arith.constant 0 : index
    %c0_2 = arith.constant 0 : index
    %2 = vector.load %arg2[%c0_1, %c0_2] : memref<32x192xbf16, #tpu.memory_space<vmem>>, vector<32x192xbf16>
    %cst = arith.constant dense<0.000000e+00> : vector<16x192xf32>
    %3 = tpu.matmul %1, %2, %cst {dimension_numbers = #tpu.dot_dimension_numbers<[1], [0], [0], [1], [0, 0, 1, 1], [], []>} : vector<16x32xbf16>, vector<32x192xbf16>, vector<16x192xf32> -> vector<16x192xf32>
    %4 = vector.extract_strided_slice %3 {offsets = [0, 0], sizes = [8, 16], strides = [1, 1]} : vector<16x192xf32> to vector<8x16xf32>
    %5 = vector.extract_strided_slice %3 {offsets = [0, 64], sizes = [8, 16], strides = [1, 1]} : vector<16x192xf32> to vector<8x16xf32>
    %6 = vector.extract_strided_slice %3 {offsets = [0, 128], sizes = [8, 16], strides = [1, 1]} : vector<16x192xf32> to vector<8x16xf32>
    %7 = arith.truncf %4 : vector<8x16xf32> to vector<8x16xbf16>
    %8 = arith.truncf %5 : vector<8x16xf32> to vector<8x16xbf16>
    %cst_3 = arith.constant dense<0.000000e+00> : vector<8x8xf32>
    %9 = tpu.matmul %7, %8, %cst_3 {dimension_numbers = #tpu.dot_dimension_numbers<[1], [1], [0], [0], [0, 0, 1, 0], [], []>} : vector<8x16xbf16>, vector<8x16xbf16>, vector<8x8xf32> -> vector<8x8xf32>
    %cst_4 = arith.constant dense<0xFF800000> : vector<8xf32>
    %10 = vector.multi_reduction <maximumf>, %9, %cst_4 [1] : vector<8x8xf32> to vector<8xf32>
    %11 = vector.shape_cast %10 : vector<8xf32> to vector<8x1xf32>
    %12 = vector.broadcast %11 : vector<8x1xf32> to vector<8x8xf32>
    %13 = arith.subf %9, %12 : vector<8x8xf32>
    %14 = math.exp %13 : vector<8x8xf32>
    %cst_5 = arith.constant dense<0.000000e+00> : vector<8xf32>
    %15 = vector.multi_reduction <add>, %14, %cst_5 [1] : vector<8x8xf32> to vector<8xf32>
    %16 = vector.shape_cast %15 : vector<8xf32> to vector<8x1xf32>
    %17 = tpu.reciprocal %16 {approx = true} : vector<8x1xf32> -> vector<8x1xf32>
    %18 = arith.truncf %14 : vector<8x8xf32> to vector<8x8xbf16>
    %19 = arith.truncf %6 : vector<8x16xf32> to vector<8x16xbf16>
    %cst_6 = arith.constant dense<0.000000e+00> : vector<8x16xf32>
    %20 = tpu.matmul %18, %19, %cst_6 {dimension_numbers = #tpu.dot_dimension_numbers<[1], [0], [0], [1], [0, 0, 1, 1], [], []>} : vector<8x8xbf16>, vector<8x16xbf16>, vector<8x16xf32> -> vector<8x16xf32>
    %21 = vector.broadcast %17 : vector<8x1xf32> to vector<8x16xf32>
    %22 = arith.mulf %20, %21 : vector<8x16xf32>
    %c0_7 = arith.constant 0 : index
    %c0_8 = arith.constant 0 : index
    %23 = vector.load %arg6[%c0_7, %c0_8] : memref<16x64xf32, #tpu.memory_space<vmem>>, vector<8x16xf32>
    tpu.vector_store %arg6[%c0_7, %c0_8], %22 {strides = array<i32>} : memref<16x64xf32, #tpu.memory_space<vmem>>, vector<8x16xf32>,
    %24 = vector.extract_strided_slice %3 {offsets = [0, 16], sizes = [8, 16], strides = [1, 1]} : vector<16x192xf32> to vector<8x16xf32>
    %25 = vector.extract_strided_slice %3 {offsets = [0, 80], sizes = [8, 16], strides = [1, 1]} : vector<16x192xf32> to vector<8x16xf32>
    %26 = vector.extract_strided_slice %3 {offsets = [0, 144], sizes = [8, 16], strides = [1, 1]} : vector<16x192xf32> to vector<8x16xf32>
    %27 = arith.truncf %24 : vector<8x16xf32> to vector<8x16xbf16>
    %28 = arith.truncf %25 : vector<8x16xf32> to vector<8x16xbf16>
    %cst_9 = arith.constant dense<0.000000e+00> : vector<8x8xf32>
    %29 = tpu.matmul %27, %28, %cst_9 {dimension_numbers = #tpu.dot_dimension_numbers<[1], [1], [0], [0], [0, 0, 1, 0], [], []>} : vector<8x16xbf16>, vector<8x16xbf16>, vector<8x8xf32> -> vector<8x8xf32>
    %cst_10 = arith.constant dense<0xFF800000> : vector<8xf32>
    %30 = vector.multi_reduction <maximumf>, %29, %cst_10 [1] : vector<8x8xf32> to vector<8xf32>
    %31 = vector.shape_cast %30 : vector<8xf32> to vector<8x1xf32>
    %32 = vector.broadcast %31 : vector<8x1xf32> to vector<8x8xf32>
    %33 = arith.subf %29, %32 : vector<8x8xf32>
    %34 = math.exp %33 : vector<8x8xf32>
    %cst_11 = arith.constant dense<0.000000e+00> : vector<8xf32>
    %35 = vector.multi_reduction <add>, %34, %cst_11 [1] : vector<8x8xf32> to vector<8xf32>
    %36 = vector.shape_cast %35 : vector<8xf32> to vector<8x1xf32>
    %37 = tpu.reciprocal %36 {approx = true} : vector<8x1xf32> -> vector<8x1xf32>
    %38 = arith.truncf %34 : vector<8x8xf32> to vector<8x8xbf16>
    %39 = arith.truncf %26 : vector<8x16xf32> to vector<8x16xbf16>
    %cst_12 = arith.constant dense<0.000000e+00> : vector<8x16xf32>
    %40 = tpu.matmul %38, %39, %cst_12 {dimension_numbers = #tpu.dot_dimension_numbers<[1], [0], [0], [1], [0, 0, 1, 1], [], []>} : vector<8x8xbf16>, vector<8x16xbf16>, vector<8x16xf32> -> vector<8x16xf32>
    %41 = vector.broadcast %37 : vector<8x1xf32> to vector<8x16xf32>
    %42 = arith.mulf %40, %41 : vector<8x16xf32>
    %c0_13 = arith.constant 0 : index
    %c16 = arith.constant 16 : index
    %43 = vector.load %arg6[%c0_13, %c16] : memref<16x64xf32, #tpu.memory_space<vmem>>, vector<8x16xf32>
    tpu.vector_store %arg6[%c0_13, %c16], %42 {strides = array<i32>} : memref<16x64xf32, #tpu.memory_space<vmem>>, vector<8x16xf32>,
    %44 = vector.extract_strided_slice %3 {offsets = [0, 32], sizes = [8, 16], strides = [1, 1]} : vector<16x192xf32> to vector<8x16xf32>
    %45 = vector.extract_strided_slice %3 {offsets = [0, 96], sizes = [8, 16], strides = [1, 1]} : vector<16x192xf32> to vector<8x16xf32>
    %46 = vector.extract_strided_slice %3 {offsets = [0, 160], sizes = [8, 16], strides = [1, 1]} : vector<16x192xf32> to vector<8x16xf32>
    %47 = arith.truncf %44 : vector<8x16xf32> to vector<8x16xbf16>
    %48 = arith.truncf %45 : vector<8x16xf32> to vector<8x16xbf16>
    %cst_14 = arith.constant dense<0.000000e+00> : vector<8x8xf32>
    %49 = tpu.matmul %47, %48, %cst_14 {dimension_numbers = #tpu.dot_dimension_numbers<[1], [1], [0], [0], [0, 0, 1, 0], [], []>} : vector<8x16xbf16>, vector<8x16xbf16>, vector<8x8xf32> -> vector<8x8xf32>
    %cst_15 = arith.constant dense<0xFF800000> : vector<8xf32>
    %50 = vector.multi_reduction <maximumf>, %49, %cst_15 [1] : vector<8x8xf32> to vector<8xf32>
    %51 = vector.shape_cast %50 : vector<8xf32> to vector<8x1xf32>
    %52 = vector.broadcast %51 : vector<8x1xf32> to vector<8x8xf32>
    %53 = arith.subf %49, %52 : vector<8x8xf32>
    %54 = math.exp %53 : vector<8x8xf32>
    %cst_16 = arith.constant dense<0.000000e+00> : vector<8xf32>
    %55 = vector.multi_reduction <add>, %54, %cst_16 [1] : vector<8x8xf32> to vector<8xf32>
    %56 = vector.shape_cast %55 : vector<8xf32> to vector<8x1xf32>
    %57 = tpu.reciprocal %56 {approx = true} : vector<8x1xf32> -> vector<8x1xf32>
    %58 = arith.truncf %54 : vector<8x8xf32> to vector<8x8xbf16>
    %59 = arith.truncf %46 : vector<8x16xf32> to vector<8x16xbf16>
    %cst_17 = arith.constant dense<0.000000e+00> : vector<8x16xf32>
    %60 = tpu.matmul %58, %59, %cst_17 {dimension_numbers = #tpu.dot_dimension_numbers<[1], [0], [0], [1], [0, 0, 1, 1], [], []>} : vector<8x8xbf16>, vector<8x16xbf16>, vector<8x16xf32> -> vector<8x16xf32>
    %61 = vector.broadcast %57 : vector<8x1xf32> to vector<8x16xf32>
    %62 = arith.mulf %60, %61 : vector<8x16xf32>
    %c0_18 = arith.constant 0 : index
    %c32 = arith.constant 32 : index
    %63 = vector.load %arg6[%c0_18, %c32] : memref<16x64xf32, #tpu.memory_space<vmem>>, vector<8x16xf32>
    tpu.vector_store %arg6[%c0_18, %c32], %62 {strides = array<i32>} : memref<16x64xf32, #tpu.memory_space<vmem>>, vector<8x16xf32>,
    %64 = vector.extract_strided_slice %3 {offsets = [0, 48], sizes = [8, 16], strides = [1, 1]} : vector<16x192xf32> to vector<8x16xf32>
    %65 = vector.extract_strided_slice %3 {offsets = [0, 112], sizes = [8, 16], strides = [1, 1]} : vector<16x192xf32> to vector<8x16xf32>
    %66 = vector.extract_strided_slice %3 {offsets = [0, 176], sizes = [8, 16], strides = [1, 1]} : vector<16x192xf32> to vector<8x16xf32>
    %67 = arith.truncf %64 : vector<8x16xf32> to vector<8x16xbf16>
    %68 = arith.truncf %65 : vector<8x16xf32> to vector<8x16xbf16>
    %cst_19 = arith.constant dense<0.000000e+00> : vector<8x8xf32>
    %69 = tpu.matmul %67, %68, %cst_19 {dimension_numbers = #tpu.dot_dimension_numbers<[1], [1], [0], [0], [0, 0, 1, 0], [], []>} : vector<8x16xbf16>, vector<8x16xbf16>, vector<8x8xf32> -> vector<8x8xf32>
    %cst_20 = arith.constant dense<0xFF800000> : vector<8xf32>
    %70 = vector.multi_reduction <maximumf>, %69, %cst_20 [1] : vector<8x8xf32> to vector<8xf32>
    %71 = vector.shape_cast %70 : vector<8xf32> to vector<8x1xf32>
    %72 = vector.broadcast %71 : vector<8x1xf32> to vector<8x8xf32>
    %73 = arith.subf %69, %72 : vector<8x8xf32>
    %74 = math.exp %73 : vector<8x8xf32>
    %cst_21 = arith.constant dense<0.000000e+00> : vector<8xf32>
    %75 = vector.multi_reduction <add>, %74, %cst_21 [1] : vector<8x8xf32> to vector<8xf32>
    %76 = vector.shape_cast %75 : vector<8xf32> to vector<8x1xf32>
    %77 = tpu.reciprocal %76 {approx = true} : vector<8x1xf32> -> vector<8x1xf32>
    %78 = arith.truncf %74 : vector<8x8xf32> to vector<8x8xbf16>
    %79 = arith.truncf %66 : vector<8x16xf32> to vector<8x16xbf16>
    %cst_22 = arith.constant dense<0.000000e+00> : vector<8x16xf32>
    %80 = tpu.matmul %78, %79, %cst_22 {dimension_numbers = #tpu.dot_dimension_numbers<[1], [0], [0], [1], [0, 0, 1, 1], [], []>} : vector<8x8xbf16>, vector<8x16xbf16>, vector<8x16xf32> -> vector<8x16xf32>
    %81 = vector.broadcast %77 : vector<8x1xf32> to vector<8x16xf32>
    %82 = arith.mulf %80, %81 : vector<8x16xf32>
    %c0_23 = arith.constant 0 : index
    %c48 = arith.constant 48 : index
    %83 = vector.load %arg6[%c0_23, %c48] : memref<16x64xf32, #tpu.memory_space<vmem>>, vector<8x16xf32>
    tpu.vector_store %arg6[%c0_23, %c48], %82 {strides = array<i32>} : memref<16x64xf32, #tpu.memory_space<vmem>>, vector<8x16xf32>,
    %84 = vector.extract_strided_slice %3 {offsets = [8, 0], sizes = [8, 16], strides = [1, 1]} : vector<16x192xf32> to vector<8x16xf32>
    %85 = vector.extract_strided_slice %3 {offsets = [8, 64], sizes = [8, 16], strides = [1, 1]} : vector<16x192xf32> to vector<8x16xf32>
    %86 = vector.extract_strided_slice %3 {offsets = [8, 128], sizes = [8, 16], strides = [1, 1]} : vector<16x192xf32> to vector<8x16xf32>
    %87 = arith.truncf %84 : vector<8x16xf32> to vector<8x16xbf16>
    %88 = arith.truncf %85 : vector<8x16xf32> to vector<8x16xbf16>
    %cst_24 = arith.constant dense<0.000000e+00> : vector<8x8xf32>
    %89 = tpu.matmul %87, %88, %cst_24 {dimension_numbers = #tpu.dot_dimension_numbers<[1], [1], [0], [0], [0, 0, 1, 0], [], []>} : vector<8x16xbf16>, vector<8x16xbf16>, vector<8x8xf32> -> vector<8x8xf32>
    %cst_25 = arith.constant dense<0xFF800000> : vector<8xf32>
    %90 = vector.multi_reduction <maximumf>, %89, %cst_25 [1] : vector<8x8xf32> to vector<8xf32>
    %91 = vector.shape_cast %90 : vector<8xf32> to vector<8x1xf32>
    %92 = vector.broadcast %91 : vector<8x1xf32> to vector<8x8xf32>
    %93 = arith.subf %89, %92 : vector<8x8xf32>
    %94 = math.exp %93 : vector<8x8xf32>
    %cst_26 = arith.constant dense<0.000000e+00> : vector<8xf32>
    %95 = vector.multi_reduction <add>, %94, %cst_26 [1] : vector<8x8xf32> to vector<8xf32>
    %96 = vector.shape_cast %95 : vector<8xf32> to vector<8x1xf32>
    %97 = tpu.reciprocal %96 {approx = true} : vector<8x1xf32> -> vector<8x1xf32>
    %98 = arith.truncf %94 : vector<8x8xf32> to vector<8x8xbf16>
    %99 = arith.truncf %86 : vector<8x16xf32> to vector<8x16xbf16>
    %cst_27 = arith.constant dense<0.000000e+00> : vector<8x16xf32>
    %100 = tpu.matmul %98, %99, %cst_27 {dimension_numbers = #tpu.dot_dimension_numbers<[1], [0], [0], [1], [0, 0, 1, 1], [], []>} : vector<8x8xbf16>, vector<8x16xbf16>, vector<8x16xf32> -> vector<8x16xf32>
    %101 = vector.broadcast %97 : vector<8x1xf32> to vector<8x16xf32>
    %102 = arith.mulf %100, %101 : vector<8x16xf32>
    %c8 = arith.constant 8 : index
    %c0_28 = arith.constant 0 : index
    %103 = vector.load %arg6[%c8, %c0_28] : memref<16x64xf32, #tpu.memory_space<vmem>>, vector<8x16xf32>
    tpu.vector_store %arg6[%c8, %c0_28], %102 {strides = array<i32>} : memref<16x64xf32, #tpu.memory_space<vmem>>, vector<8x16xf32>,
    %104 = vector.extract_strided_slice %3 {offsets = [8, 16], sizes = [8, 16], strides = [1, 1]} : vector<16x192xf32> to vector<8x16xf32>
    %105 = vector.extract_strided_slice %3 {offsets = [8, 80], sizes = [8, 16], strides = [1, 1]} : vector<16x192xf32> to vector<8x16xf32>
    %106 = vector.extract_strided_slice %3 {offsets = [8, 144], sizes = [8, 16], strides = [1, 1]} : vector<16x192xf32> to vector<8x16xf32>
    %107 = arith.truncf %104 : vector<8x16xf32> to vector<8x16xbf16>
    %108 = arith.truncf %105 : vector<8x16xf32> to vector<8x16xbf16>
    %cst_29 = arith.constant dense<0.000000e+00> : vector<8x8xf32>
    %109 = tpu.matmul %107, %108, %cst_29 {dimension_numbers = #tpu.dot_dimension_numbers<[1], [1], [0], [0], [0, 0, 1, 0], [], []>} : vector<8x16xbf16>, vector<8x16xbf16>, vector<8x8xf32> -> vector<8x8xf32>
    %cst_30 = arith.constant dense<0xFF800000> : vector<8xf32>
    %110 = vector.multi_reduction <maximumf>, %109, %cst_30 [1] : vector<8x8xf32> to vector<8xf32>
    %111 = vector.shape_cast %110 : vector<8xf32> to vector<8x1xf32>
    %112 = vector.broadcast %111 : vector<8x1xf32> to vector<8x8xf32>
    %113 = arith.subf %109, %112 : vector<8x8xf32>
    %114 = math.exp %113 : vector<8x8xf32>
    %cst_31 = arith.constant dense<0.000000e+00> : vector<8xf32>
    %115 = vector.multi_reduction <add>, %114, %cst_31 [1] : vector<8x8xf32> to vector<8xf32>
    %116 = vector.shape_cast %115 : vector<8xf32> to vector<8x1xf32>
    %117 = tpu.reciprocal %116 {approx = true} : vector<8x1xf32> -> vector<8x1xf32>
    %118 = arith.truncf %114 : vector<8x8xf32> to vector<8x8xbf16>
    %119 = arith.truncf %106 : vector<8x16xf32> to vector<8x16xbf16>
    %cst_32 = arith.constant dense<0.000000e+00> : vector<8x16xf32>
    %120 = tpu.matmul %118, %119, %cst_32 {dimension_numbers = #tpu.dot_dimension_numbers<[1], [0], [0], [1], [0, 0, 1, 1], [], []>} : vector<8x8xbf16>, vector<8x16xbf16>, vector<8x16xf32> -> vector<8x16xf32>
    %121 = vector.broadcast %117 : vector<8x1xf32> to vector<8x16xf32>
    %122 = arith.mulf %120, %121 : vector<8x16xf32>
    %c8_33 = arith.constant 8 : index
    %c16_34 = arith.constant 16 : index
    %123 = vector.load %arg6[%c8_33, %c16_34] : memref<16x64xf32, #tpu.memory_space<vmem>>, vector<8x16xf32>
    tpu.vector_store %arg6[%c8_33, %c16_34], %122 {strides = array<i32>} : memref<16x64xf32, #tpu.memory_space<vmem>>, vector<8x16xf32>,
    %124 = vector.extract_strided_slice %3 {offsets = [8, 32], sizes = [8, 16], strides = [1, 1]} : vector<16x192xf32> to vector<8x16xf32>
    %125 = vector.extract_strided_slice %3 {offsets = [8, 96], sizes = [8, 16], strides = [1, 1]} : vector<16x192xf32> to vector<8x16xf32>
    %126 = vector.extract_strided_slice %3 {offsets = [8, 160], sizes = [8, 16], strides = [1, 1]} : vector<16x192xf32> to vector<8x16xf32>
    %127 = arith.truncf %124 : vector<8x16xf32> to vector<8x16xbf16>
    %128 = arith.truncf %125 : vector<8x16xf32> to vector<8x16xbf16>
    %cst_35 = arith.constant dense<0.000000e+00> : vector<8x8xf32>
    %129 = tpu.matmul %127, %128, %cst_35 {dimension_numbers = #tpu.dot_dimension_numbers<[1], [1], [0], [0], [0, 0, 1, 0], [], []>} : vector<8x16xbf16>, vector<8x16xbf16>, vector<8x8xf32> -> vector<8x8xf32>
    %cst_36 = arith.constant dense<0xFF800000> : vector<8xf32>
    %130 = vector.multi_reduction <maximumf>, %129, %cst_36 [1] : vector<8x8xf32> to vector<8xf32>
    %131 = vector.shape_cast %130 : vector<8xf32> to vector<8x1xf32>
    %132 = vector.broadcast %131 : vector<8x1xf32> to vector<8x8xf32>
    %133 = arith.subf %129, %132 : vector<8x8xf32>
    %134 = math.exp %133 : vector<8x8xf32>
    %cst_37 = arith.constant dense<0.000000e+00> : vector<8xf32>
    %135 = vector.multi_reduction <add>, %134, %cst_37 [1] : vector<8x8xf32> to vector<8xf32>
    %136 = vector.shape_cast %135 : vector<8xf32> to vector<8x1xf32>
    %137 = tpu.reciprocal %136 {approx = true} : vector<8x1xf32> -> vector<8x1xf32>
    %138 = arith.truncf %134 : vector<8x8xf32> to vector<8x8xbf16>
    %139 = arith.truncf %126 : vector<8x16xf32> to vector<8x16xbf16>
    %cst_38 = arith.constant dense<0.000000e+00> : vector<8x16xf32>
    %140 = tpu.matmul %138, %139, %cst_38 {dimension_numbers = #tpu.dot_dimension_numbers<[1], [0], [0], [1], [0, 0, 1, 1], [], []>} : vector<8x8xbf16>, vector<8x16xbf16>, vector<8x16xf32> -> vector<8x16xf32>
    %141 = vector.broadcast %137 : vector<8x1xf32> to vector<8x16xf32>
    %142 = arith.mulf %140, %141 : vector<8x16xf32>
    %c8_39 = arith.constant 8 : index
    %c32_40 = arith.constant 32 : index
    %143 = vector.load %arg6[%c8_39, %c32_40] : memref<16x64xf32, #tpu.memory_space<vmem>>, vector<8x16xf32>
    tpu.vector_store %arg6[%c8_39, %c32_40], %142 {strides = array<i32>} : memref<16x64xf32, #tpu.memory_space<vmem>>, vector<8x16xf32>,
    %144 = vector.extract_strided_slice %3 {offsets = [8, 48], sizes = [8, 16], strides = [1, 1]} : vector<16x192xf32> to vector<8x16xf32>
    %145 = vector.extract_strided_slice %3 {offsets = [8, 112], sizes = [8, 16], strides = [1, 1]} : vector<16x192xf32> to vector<8x16xf32>
    %146 = vector.extract_strided_slice %3 {offsets = [8, 176], sizes = [8, 16], strides = [1, 1]} : vector<16x192xf32> to vector<8x16xf32>
    %147 = arith.truncf %144 : vector<8x16xf32> to vector<8x16xbf16>
    %148 = arith.truncf %145 : vector<8x16xf32> to vector<8x16xbf16>
    %cst_41 = arith.constant dense<0.000000e+00> : vector<8x8xf32>
    %149 = tpu.matmul %147, %148, %cst_41 {dimension_numbers = #tpu.dot_dimension_numbers<[1], [1], [0], [0], [0, 0, 1, 0], [], []>} : vector<8x16xbf16>, vector<8x16xbf16>, vector<8x8xf32> -> vector<8x8xf32>
    %cst_42 = arith.constant dense<0xFF800000> : vector<8xf32>
    %150 = vector.multi_reduction <maximumf>, %149, %cst_42 [1] : vector<8x8xf32> to vector<8xf32>
    %151 = vector.shape_cast %150 : vector<8xf32> to vector<8x1xf32>
    %152 = vector.broadcast %151 : vector<8x1xf32> to vector<8x8xf32>
    %153 = arith.subf %149, %152 : vector<8x8xf32>
    %154 = math.exp %153 : vector<8x8xf32>
    %cst_43 = arith.constant dense<0.000000e+00> : vector<8xf32>
    %155 = vector.multi_reduction <add>, %154, %cst_43 [1] : vector<8x8xf32> to vector<8xf32>
    %156 = vector.shape_cast %155 : vector<8xf32> to vector<8x1xf32>
    %157 = tpu.reciprocal %156 {approx = true} : vector<8x1xf32> -> vector<8x1xf32>
    %158 = arith.truncf %154 : vector<8x8xf32> to vector<8x8xbf16>
    %159 = arith.truncf %146 : vector<8x16xf32> to vector<8x16xbf16>
    %cst_44 = arith.constant dense<0.000000e+00> : vector<8x16xf32>
    %160 = tpu.matmul %158, %159, %cst_44 {dimension_numbers = #tpu.dot_dimension_numbers<[1], [0], [0], [1], [0, 0, 1, 1], [], []>} : vector<8x8xbf16>, vector<8x16xbf16>, vector<8x16xf32> -> vector<8x16xf32>
    %161 = vector.broadcast %157 : vector<8x1xf32> to vector<8x16xf32>
    %162 = arith.mulf %160, %161 : vector<8x16xf32>
    %c8_45 = arith.constant 8 : index
    %c48_46 = arith.constant 48 : index
    %163 = vector.load %arg6[%c8_45, %c48_46] : memref<16x64xf32, #tpu.memory_space<vmem>>, vector<8x16xf32>
    tpu.vector_store %arg6[%c8_45, %c48_46], %162 {strides = array<i32>} : memref<16x64xf32, #tpu.memory_space<vmem>>, vector<8x16xf32>,
    %c0_47 = arith.constant 0 : index
    %c0_48 = arith.constant 0 : index
    %164 = vector.load %arg6[%c0_47, %c0_48] : memref<16x64xf32, #tpu.memory_space<vmem>>, vector<16x64xf32>
    %165 = arith.truncf %164 : vector<16x64xf32> to vector<16x64xbf16>
    %c0_49 = arith.constant 0 : index
    %c0_50 = arith.constant 0 : index
    %166 = vector.load %arg3[%c0_49, %c0_50] : memref<64x32xbf16, #tpu.memory_space<vmem>>, vector<64x32xbf16>
    %cst_51 = arith.constant dense<0.000000e+00> : vector<16x32xf32>
    %167 = tpu.matmul %165, %166, %cst_51 {dimension_numbers = #tpu.dot_dimension_numbers<[1], [0], [0], [1], [0, 0, 1, 1], [], []>} : vector<16x64xbf16>, vector<64x32xbf16>, vector<16x32xf32> -> vector<16x32xf32>
    %c0_52 = arith.constant 0 : index
    %c0_53 = arith.constant 0 : index
    %168 = vector.load %arg4[%c0_52, %c0_53] : memref<1x32xf32, #tpu.memory_space<vmem>>, vector<1x32xf32>
    %169 = vector.broadcast %168 : vector<1x32xf32> to vector<16x32xf32>
    %170 = arith.addf %167, %169 : vector<16x32xf32>
    %171 = arith.addf %170, %0 : vector<16x32xf32>
    %c0_54 = arith.constant 0 : index
    %c0_55 = arith.constant 0 : index
    %172 = vector.load %arg5[%c0_54, %c0_55] : memref<16x32xf32, #tpu.memory_space<vmem>>, vector<16x32xf32>
    tpu.vector_store %arg5[%c0_54, %c0_55], %171 {strides = array<i32>} : memref<16x32xf32, #tpu.memory_space<vmem>>, vector<16x32xf32>,
    return
  }
  func.func @transform_0(%arg0: i32) -> (i32, i32) {
    %c0_i32 = arith.constant 0 : i32
    %c0_i32_0 = arith.constant 0 : i32
    %c0_i32_1 = arith.constant 0 : i32
    return %c0_i32, %c0_i32_0 : i32, i32
  }
  func.func @transform_1(%arg0: i32) -> (i32, i32) {
    %c0_i32 = arith.constant 0 : i32
    %c0_i32_0 = arith.constant 0 : i32
    %c0_i32_1 = arith.constant 0 : i32
    return %c0_i32, %c0_i32_0 : i32, i32
  }
  func.func @transform_2(%arg0: i32) -> (i32, i32) {
    %c0_i32 = arith.constant 0 : i32
    %c0_i32_0 = arith.constant 0 : i32
    %c0_i32_1 = arith.constant 0 : i32
    return %c0_i32, %c0_i32_0 : i32, i32
  }
  func.func @transform_3(%arg0: i32) -> (i32, i32) {
    %c0_i32 = arith.constant 0 : i32
    %c0_i32_0 = arith.constant 0 : i32
    %c0_i32_1 = arith.constant 0 : i32
    return %c0_i32, %c0_i32_0 : i32, i32
  }
  func.func @transform_4(%arg0: i32) -> (i32, i32) {
    %c0_i32 = arith.constant 0 : i32
    %c0_i32_0 = arith.constant 0 : i32
    %c0_i32_1 = arith.constant 0 : i32
    return %c0_i32, %c0_i32_0 : i32, i32
  }
}

</mosaic_0001>

<llo_original>
// kernel: tpu_custom_call.1
$region0: #{tpu_custom_call.1}
  #allocation0 [shape = 'u32[]', space=smem, size = 0x4, offset = 0x4, fixed_abs, tag = 'smem constant byte address 0x4 - core index']
  #allocation1 [shape = 'u32[144,128]{1,0:T(1,128)}', space=vmem, size = 0x12000, scoped, tag = 'internal scratch']
  #allocation2 [shape = 'f32[16,64]{1,0:T(8,128)}', space=vmem, size = 0x2000, scoped, tag = 'scratch operand']
  %s0 = inlined_call_operand.vmem [shape: f32[16,32], index: 0, kind: input, shape index: {}]
  %s1 = inlined_call_operand.vmem [shape: bf16[32,192], index: 1, kind: input, shape index: {}]
  %s2 = inlined_call_operand.vmem [shape: bf16[64,32], index: 2, kind: input, shape index: {}]
  %s3 = inlined_call_operand.vmem [shape: f32[1,32], index: 3, kind: input, shape index: {}]
  %s4 = inlined_call_operand.hbm [shape: f32[16,32], index: 4, kind: output, shape index: {}]
  %s5 = sld [smem:[#allocation0]]
  $region26: #{tpu_custom_call.1} parent=0
    _
  %s7 = ssub.s32 1, %s5
  %s8 = scalar_select 0, %s7, %s5
  $region1: #{tpu_custom_call.1} parent=0
    #allocation3 [shape = 'u8[8192]{0}', space=vmem, size = 0x2000, scoped, tag = 'output window, operand 0, single buffered']
    #allocation4 [shape = 's32[1]{0}', space=sflag, size = 0x4, scoped, tag = 'scoped memory for tpu_custom_call.1']
    %9 = vsyncpa [#allocation4], 0
    // Predicated region
    $region2: #{tpu_custom_call.1} parent=1 // pred_check
      _
    $region3: #{tpu_custom_call.1} parent=1 // pred_check_branch
      %11 = sbr.rel (0) target = $region5
    $region4: #{tpu_custom_call.1} parent=1 // pred_region
      _
    $region5: #{tpu_custom_call.1} parent=1 // pred_fallthru
      _
    // Predicated region
    $region6: #{tpu_custom_call.1} parent=1 // pred_check
      _
    $region7: #{tpu_custom_call.1} parent=1 // pred_check_branch
      %13 = sbr.rel (0) target = $region9
    $region8: #{tpu_custom_call.1} parent=1 // pred_region
      _
    $region9: #{tpu_custom_call.1} parent=1 // pred_fallthru
      _
    // Predicated region
    $region10: #{tpu_custom_call.1} parent=1 // pred_check
      _
    $region11: #{tpu_custom_call.1} parent=1 // pred_check_branch
      %15 = sbr.rel (0) target = $region13
    $region12: #{tpu_custom_call.1} parent=1 // pred_region
      _
    $region13: #{tpu_custom_call.1} parent=1 // pred_fallthru
      _
    // Predicated region
    $region14: #{tpu_custom_call.1} parent=1 // pred_check
      _
    $region15: #{tpu_custom_call.1} parent=1 // pred_check_branch
      %17 = sbr.rel (0) target = $region17
    $region16: #{tpu_custom_call.1} parent=1 // pred_region
      _
    $region17: #{tpu_custom_call.1} parent=1 // pred_fallthru
      _
    %v19 = vld [vmem:[%s0] sm:$0xff]
    %v20 = vld [vmem:[%s0 + $0x8] sm:$0xff]
    %v21 = vpack.c.bf16 %v20, %v19
    %v22 = vld [vmem:[%s1] sm:$0xff]
    %v23 = vld [vmem:[%s1 + $0x8] sm:$0xff]
    %v24 = vld [vmem:[%s1 + $0x10] sm:$0xff]
    %v25 = vld [vmem:[%s1 + $0x18] sm:$0xff]
    %v30 = vunpack.c.l.b16 %v22
    %v31 = vunpack.c.h.b16 %v22
    %v32 = vunpack.c.l.b16 %v23
    %v33 = vunpack.c.h.b16 %v23
    %v34 = vunpack.c.l.b16 %v24
    %v35 = vunpack.c.h.b16 %v24
    %v36 = vunpack.c.l.b16 %v25
    %v37 = vunpack.c.h.b16 %v25
    %v38 = vpack.c.b16 %v32, %v30
    %v39 = vpack.c.b16 %v33, %v31
    %v40 = vpack.c.b16 %v36, %v34
    %v41 = vpack.c.b16 %v37, %v35
    %vm46 = vcmask 261120
    %v48 = vsel %vm46, %v21, 0
    %50 = vmatprep.subr.bf16.mxu0 %v39
    %51 = vmatpush1.bf16.msra.mxu0 %v38
    %52 = vmatprep.subr.bf16.mxu0 %v41
    %53 = vmatpush1.bf16.msra.mxu0 %v40
    %54 = vmatprep.subr.bf16.mxu0 0
    %55 = vmatpush1.bf16.msra.mxu0 0
    %56 = vmatprep.subr.bf16.mxu0 0
    %57 = vmatpush1.bf16.msra.mxu0 0
    %58 = vmatprep.subr.bf16.mxu0 0
    %59 = vmatpush1.bf16.msra.mxu0 0
    %60 = vmatprep.subr.bf16.mxu0 0
    %61 = vmatpush1.bf16.msra.mxu0 0
    %62 = vmatprep.subr.bf16.mxu0 0
    %63 = vmatpush1.bf16.msra.mxu0 0
    %64 = vmatprep.subr.bf16.mxu0 0
    %65 = vmatpush1.bf16.msra.mxu0 0
    %66 = vmatprep.subr.bf16.mxu0 0
    %67 = vmatpush1.bf16.msra.mxu0 0
    %68 = vmatprep.subr.bf16.mxu0 0
    %69 = vmatpush1.bf16.msra.mxu0 0
    %70 = vmatprep.subr.bf16.mxu0 0
    %71 = vmatpush1.bf16.msra.mxu0 0
    %72 = vmatprep.subr.bf16.mxu0 0
    %73 = vmatpush1.bf16.msra.mxu0 0
    %74 = vmatprep.subr.bf16.mxu0 0
    %75 = vmatpush1.bf16.msra.mxu0 0
    %76 = vmatprep.subr.bf16.mxu0 0
    %77 = vmatpush1.bf16.msra.mxu0 0
    %78 = vmatprep.subr.bf16.mxu0 0
    %79 = vmatpush1.bf16.msra.mxu0 0
    %80 = vmatprep.subr.bf16.mxu0 0
    %81 = vmatpush1.bf16.msra.mxu0 0
    %82 = vmatprep.mubr.bf16.mxu0 0
    %83 = vmatmul.mubr.bf16.gmra.mrb[0].mxu0 %v48
    %v84 = vpop.f32.mrb[0].mxu0
    %v85 = vadd.f32 0.0, %v84
    %v86 = vpop.f32.mrb[0].mxu0
    %v87 = vadd.f32 0.0, %v86
    %v88 = vpop.f32.mrb[0].mxu0
    %v89 = vadd.f32 0.0, %v88
    %v90 = vpop.f32.mrb[0].mxu0
    %v91 = vadd.f32 0.0, %v90
    %92 = vdwg.mxu0
    %v93 = vpack.c.bf16 %v85, %v85
    %95 = vrot.lane.b32.xlu0 %v93, 64
    %v96 = vpop.permute.xlu0 %95
    %vm97 = vcmask 130048
    %v99 = vsel %vm97, %v93, 0
    %v102 = vsel %vm97, %v96, 0
    %104 = vmatprep.subr.bf16.mxu0 0
    %105 = vmatpush1.bf16.xpose.msra.mxu0 %v102
    %106 = vmatprep.subr.bf16.mxu0 0
    %107 = vmatpush1.bf16.xpose.msra.mxu0 0
    %108 = vmatprep.subr.bf16.mxu0 0
    %109 = vmatpush1.bf16.xpose.msra.mxu0 0
    %110 = vmatprep.subr.bf16.mxu0 0
    %111 = vmatpush1.bf16.xpose.msra.mxu0 0
    %112 = vmatprep.subr.bf16.mxu0 0
    %113 = vmatpush1.bf16.xpose.msra.mxu0 0
    %114 = vmatprep.subr.bf16.mxu0 0
    %115 = vmatpush1.bf16.xpose.msra.mxu0 0
    %116 = vmatprep.subr.bf16.mxu0 0
    %117 = vmatpush1.bf16.xpose.msra.mxu0 0
    %118 = vmatprep.subr.bf16.mxu0 0
    %119 = vmatpush1.bf16.xpose.msra.mxu0 0
    %120 = vmatprep.subr.bf16.mxu0 0
    %121 = vmatpush1.bf16.xpose.msra.mxu0 0
    %122 = vmatprep.subr.bf16.mxu0 0
    %123 = vmatpush1.bf16.xpose.msra.mxu0 0
    %124 = vmatprep.subr.bf16.mxu0 0
    %125 = vmatpush1.bf16.xpose.msra.mxu0 0
    %126 = vmatprep.subr.bf16.mxu0 0
    %127 = vmatpush1.bf16.xpose.msra.mxu0 0
    %128 = vmatprep.subr.bf16.mxu0 0
    %129 = vmatpush1.bf16.xpose.msra.mxu0 0
    %130 = vmatprep.subr.bf16.mxu0 0
    %131 = vmatpush1.bf16.xpose.msra.mxu0 0
    %132 = vmatprep.subr.bf16.mxu0 0
    %133 = vmatpush1.bf16.xpose.msra.mxu0 0
    %134 = vmatprep.subr.bf16.mxu0 0
    %135 = vmatpush1.bf16.xpose.msra.mxu0 0
    %136 = vmatprep.mubr.bf16.mxu0 0
    %137 = vmatmul.mubr.bf16.gmra.mrb[0].mxu0 %v99
    %v138 = vpop.f32.mrb[0].mxu0
    %v139 = vadd.f32 0.0, %v138
    %v140 = vpop.f32.mrb[0].mxu0
    %v141 = vpop.f32.mrb[0].mxu0
    %v142 = vpop.f32.mrb[0].mxu0
    %143 = vdwg.mxu0
    %vm144 = vcmask 64512
    %v145 = vsel %vm144, %v139, -inf
    %146 = vmax.xlane.f32.xlu0 %v145
    %v147 = vpop.xlane.xlu0 %146
    %v148 = vsub.f32 %v139, %v147
    %v149 = vmul.f32 %v148, 1.442695
    %v150 = vpow.pop %v149
    %v151 = vsel %vm144, %v150, 0.0
    %152 = vadd.xlane.f32.xlu0 %v151
    %v153 = vpop.xlane.xlu0 %152
    %v154 = vrcp.pop %v153
    %v155 = vpack.c.bf16 %v150, %v150
    %v156 = vpack.c.bf16 %v87, %v87
    %v158 = vsel %vm144, %v155, 0
    %vm160 = vcmask 1043456
    %v162 = vsel %vm160, %v156, 0
    %164 = vmatprep.subr.bf16.mxu0 0
    %165 = vmatpush1.bf16.msra.mxu0 %v162
    %166 = vmatprep.subr.bf16.mxu0 0
    %167 = vmatpush1.bf16.msra.mxu0 0
    %168 = vmatprep.subr.bf16.mxu0 0
    %169 = vmatpush1.bf16.msra.mxu0 0
    %170 = vmatprep.subr.bf16.mxu0 0
    %171 = vmatpush1.bf16.msra.mxu0 0
    %172 = vmatprep.subr.bf16.mxu0 0
    %173 = vmatpush1.bf16.msra.mxu0 0
    %174 = vmatprep.subr.bf16.mxu0 0
    %175 = vmatpush1.bf16.msra.mxu0 0
    %176 = vmatprep.subr.bf16.mxu0 0
    %177 = vmatpush1.bf16.msra.mxu0 0
    %178 = vmatprep.subr.bf16.mxu0 0
    %179 = vmatpush1.bf16.msra.mxu0 0
    %180 = vmatprep.subr.bf16.mxu0 0
    %181 = vmatpush1.bf16.msra.mxu0 0
    %182 = vmatprep.subr.bf16.mxu0 0
    %183 = vmatpush1.bf16.msra.mxu0 0
    %184 = vmatprep.subr.bf16.mxu0 0
    %185 = vmatpush1.bf16.msra.mxu0 0
    %186 = vmatprep.subr.bf16.mxu0 0
    %187 = vmatpush1.bf16.msra.mxu0 0
    %188 = vmatprep.subr.bf16.mxu0 0
    %189 = vmatpush1.bf16.msra.mxu0 0
    %190 = vmatprep.subr.bf16.mxu0 0
    %191 = vmatpush1.bf16.msra.mxu0 0
    %192 = vmatprep.subr.bf16.mxu0 0
    %193 = vmatpush1.bf16.msra.mxu0 0
    %194 = vmatprep.subr.bf16.mxu0 0
    %195 = vmatpush1.bf16.msra.mxu0 0
    %196 = vmatprep.mubr.bf16.mxu0 0
    %197 = vmatmul.mubr.bf16.gmra.mrb[0].mxu0 %v158
    %v198 = vpop.f32.mrb[0].mxu0
    %v199 = vadd.f32 0.0, %v198
    %v200 = vpop.f32.mrb[0].mxu0
    %v201 = vpop.f32.mrb[0].mxu0
    %v202 = vpop.f32.mrb[0].mxu0
    %203 = vdwg.mxu0
    %v204 = vmul.f32 %v199, %v154
    %205 = vst.msk [vmem:[#allocation2] sm:$0xff] %vm97, %v204
    %206 = vrot.lane.b32.xlu0 %v93, 112
    %v207 = vpop.permute.xlu0 %206
    %208 = vrot.lane.b32.xlu0 %v93, 48
    %v209 = vpop.permute.xlu0 %208
    %v211 = vsel %vm97, %v207, 0
    %v214 = vsel %vm97, %v209, 0
    %216 = vmatprep.subr.bf16.mxu0 0
    %217 = vmatpush1.bf16.xpose.msra.mxu0 %v214
    %218 = vmatprep.subr.bf16.mxu0 0
    %219 = vmatpush1.bf16.xpose.msra.mxu0 0
    %220 = vmatprep.subr.bf16.mxu0 0
    %221 = vmatpush1.bf16.xpose.msra.mxu0 0
    %222 = vmatprep.subr.bf16.mxu0 0
    %223 = vmatpush1.bf16.xpose.msra.mxu0 0
    %224 = vmatprep.subr.bf16.mxu0 0
    %225 = vmatpush1.bf16.xpose.msra.mxu0 0
    %226 = vmatprep.subr.bf16.mxu0 0
    %227 = vmatpush1.bf16.xpose.msra.mxu0 0
    %228 = vmatprep.subr.bf16.mxu0 0
    %229 = vmatpush1.bf16.xpose.msra.mxu0 0
    %230 = vmatprep.subr.bf16.mxu0 0
    %231 = vmatpush1.bf16.xpose.msra.mxu0 0
    %232 = vmatprep.subr.bf16.mxu0 0
    %233 = vmatpush1.bf16.xpose.msra.mxu0 0
    %234 = vmatprep.subr.bf16.mxu0 0
    %235 = vmatpush1.bf16.xpose.msra.mxu0 0
    %236 = vmatprep.subr.bf16.mxu0 0
    %237 = vmatpush1.bf16.xpose.msra.mxu0 0
    %238 = vmatprep.subr.bf16.mxu0 0
    %239 = vmatpush1.bf16.xpose.msra.mxu0 0
    %240 = vmatprep.subr.bf16.mxu0 0
    %241 = vmatpush1.bf16.xpose.msra.mxu0 0
    %242 = vmatprep.subr.bf16.mxu0 0
    %243 = vmatpush1.bf16.xpose.msra.mxu0 0
    %244 = vmatprep.subr.bf16.mxu0 0
    %245 = vmatpush1.bf16.xpose.msra.mxu0 0
    %246 = vmatprep.subr.bf16.mxu0 0
    %247 = vmatpush1.bf16.xpose.msra.mxu0 0
    %248 = vmatprep.mubr.bf16.mxu0 0
    %249 = vmatmul.mubr.bf16.gmra.mrb[0].mxu0 %v211
    %v250 = vpop.f32.mrb[0].mxu0
    %v251 = vadd.f32 0.0, %v250
    %v252 = vpop.f32.mrb[0].mxu0
    %v253 = vpop.f32.mrb[0].mxu0
    %v254 = vpop.f32.mrb[0].mxu0
    %255 = vdwg.mxu0
    %v256 = vsel %vm144, %v251, -inf
    %257 = vmax.xlane.f32.xlu0 %v256
    %v258 = vpop.xlane.xlu0 %257
    %v259 = vsub.f32 %v251, %v258
    %v260 = vmul.f32 %v259, 1.442695
    %v261 = vpow.pop %v260
    %v262 = vsel %vm144, %v261, 0.0
    %263 = vadd.xlane.f32.xlu0 %v262
    %v264 = vpop.xlane.xlu0 %263
    %v265 = vrcp.pop %v264
    %v266 = vpack.c.bf16 %v261, %v261
    %268 = vrot.lane.b32.xlu0 %v156, 112
    %v269 = vpop.permute.xlu0 %268
    %v271 = vsel %vm144, %v266, 0
    %v274 = vsel %vm160, %v269, 0
    %276 = vmatprep.subr.bf16.mxu0 0
    %277 = vmatpush1.bf16.msra.mxu0 %v274
    %278 = vmatprep.subr.bf16.mxu0 0
    %279 = vmatpush1.bf16.msra.mxu0 0
    %280 = vmatprep.subr.bf16.mxu0 0
    %281 = vmatpush1.bf16.msra.mxu0 0
    %282 = vmatprep.subr.bf16.mxu0 0
    %283 = vmatpush1.bf16.msra.mxu0 0
    %284 = vmatprep.subr.bf16.mxu0 0
    %285 = vmatpush1.bf16.msra.mxu0 0
    %286 = vmatprep.subr.bf16.mxu0 0
    %287 = vmatpush1.bf16.msra.mxu0 0
    %288 = vmatprep.subr.bf16.mxu0 0
    %289 = vmatpush1.bf16.msra.mxu0 0
    %290 = vmatprep.subr.bf16.mxu0 0
    %291 = vmatpush1.bf16.msra.mxu0 0
    %292 = vmatprep.subr.bf16.mxu0 0
    %293 = vmatpush1.bf16.msra.mxu0 0
    %294 = vmatprep.subr.bf16.mxu0 0
    %295 = vmatpush1.bf16.msra.mxu0 0
    %296 = vmatprep.subr.bf16.mxu0 0
    %297 = vmatpush1.bf16.msra.mxu0 0
    %298 = vmatprep.subr.bf16.mxu0 0
    %299 = vmatpush1.bf16.msra.mxu0 0
    %300 = vmatprep.subr.bf16.mxu0 0
    %301 = vmatpush1.bf16.msra.mxu0 0
    %302 = vmatprep.subr.bf16.mxu0 0
    %303 = vmatpush1.bf16.msra.mxu0 0
    %304 = vmatprep.subr.bf16.mxu0 0
    %305 = vmatpush1.bf16.msra.mxu0 0
    %306 = vmatprep.subr.bf16.mxu0 0
    %307 = vmatpush1.bf16.msra.mxu0 0
    %308 = vmatprep.mubr.bf16.mxu0 0
    %309 = vmatmul.mubr.bf16.gmra.mrb[0].mxu0 %v271
    %v310 = vpop.f32.mrb[0].mxu0
    %v311 = vadd.f32 0.0, %v310
    %v312 = vpop.f32.mrb[0].mxu0
    %v313 = vpop.f32.mrb[0].mxu0
    %v314 = vpop.f32.mrb[0].mxu0
    %315 = vdwg.mxu0
    %v316 = vmul.f32 %v311, %v265
    %318 = vrot.lane.b32.xlu0 %v316, 16
    %v319 = vpop.permute.xlu0 %318
    %vm321 = vcmask 261248
    %322 = vst.msk [vmem:[#allocation2] sm:$0xff] %vm321, %v319
    %323 = vrot.lane.b32.xlu0 %v93, 96
    %v324 = vpop.permute.xlu0 %323
    %325 = vrot.lane.b32.xlu0 %v93, 32
    %v326 = vpop.permute.xlu0 %325
    %v328 = vsel %vm97, %v324, 0
    %v331 = vsel %vm97, %v326, 0
    %333 = vmatprep.subr.bf16.mxu0 0
    %334 = vmatpush1.bf16.xpose.msra.mxu0 %v331
    %335 = vmatprep.subr.bf16.mxu0 0
    %336 = vmatpush1.bf16.xpose.msra.mxu0 0
    %337 = vmatprep.subr.bf16.mxu0 0
    %338 = vmatpush1.bf16.xpose.msra.mxu0 0
    %339 = vmatprep.subr.bf16.mxu0 0
    %340 = vmatpush1.bf16.xpose.msra.mxu0 0
    %341 = vmatprep.subr.bf16.mxu0 0
    %342 = vmatpush1.bf16.xpose.msra.mxu0 0
    %343 = vmatprep.subr.bf16.mxu0 0
    %344 = vmatpush1.bf16.xpose.msra.mxu0 0
    %345 = vmatprep.subr.bf16.mxu0 0
    %346 = vmatpush1.bf16.xpose.msra.mxu0 0
    %347 = vmatprep.subr.bf16.mxu0 0
    %348 = vmatpush1.bf16.xpose.msra.mxu0 0
    %349 = vmatprep.subr.bf16.mxu0 0
    %350 = vmatpush1.bf16.xpose.msra.mxu0 0
    %351 = vmatprep.subr.bf16.mxu0 0
    %352 = vmatpush1.bf16.xpose.msra.mxu0 0
    %353 = vmatprep.subr.bf16.mxu0 0
    %354 = vmatpush1.bf16.xpose.msra.mxu0 0
    %355 = vmatprep.subr.bf16.mxu0 0
    %356 = vmatpush1.bf16.xpose.msra.mxu0 0
    %357 = vmatprep.subr.bf16.mxu0 0
    %358 = vmatpush1.bf16.xpose.msra.mxu0 0
    %359 = vmatprep.subr.bf16.mxu0 0
    %360 = vmatpush1.bf16.xpose.msra.mxu0 0
    %361 = vmatprep.subr.bf16.mxu0 0
    %362 = vmatpush1.bf16.xpose.msra.mxu0 0
    %363 = vmatprep.subr.bf16.mxu0 0
    %364 = vmatpush1.bf16.xpose.msra.mxu0 0
    %365 = vmatprep.mubr.bf16.mxu0 0
    %366 = vmatmul.mubr.bf16.gmra.mrb[0].mxu0 %v328
    %v367 = vpop.f32.mrb[0].mxu0
    %v368 = vadd.f32 0.0, %v367
    %v369 = vpop.f32.mrb[0].mxu0
    %v370 = vpop.f32.mrb[0].mxu0
    %v371 = vpop.f32.mrb[0].mxu0
    %372 = vdwg.mxu0
    %v373 = vsel %vm144, %v368, -inf
    %374 = vmax.xlane.f32.xlu0 %v373
    %v375 = vpop.xlane.xlu0 %374
    %v376 = vsub.f32 %v368, %v375
    %v377 = vmul.f32 %v376, 1.442695
    %v378 = vpow.pop %v377
    %v379 = vsel %vm144, %v378, 0.0
    %380 = vadd.xlane.f32.xlu0 %v379
    %v381 = vpop.xlane.xlu0 %380
    %v382 = vrcp.pop %v381
    %v383 = vpack.c.bf16 %v378, %v378
    %384 = vrot.lane.b32.xlu0 %v156, 96
    %v385 = vpop.permute.xlu0 %384
    %v387 = vsel %vm144, %v383, 0
    %v390 = vsel %vm160, %v385, 0
    %392 = vmatprep.subr.bf16.mxu0 0
    %393 = vmatpush1.bf16.msra.mxu0 %v390
    %394 = vmatprep.subr.bf16.mxu0 0
    %395 = vmatpush1.bf16.msra.mxu0 0
    %396 = vmatprep.subr.bf16.mxu0 0
    %397 = vmatpush1.bf16.msra.mxu0 0
    %398 = vmatprep.subr.bf16.mxu0 0
    %399 = vmatpush1.bf16.msra.mxu0 0
    %400 = vmatprep.subr.bf16.mxu0 0
    %401 = vmatpush1.bf16.msra.mxu0 0
    %402 = vmatprep.subr.bf16.mxu0 0
    %403 = vmatpush1.bf16.msra.mxu0 0
    %404 = vmatprep.subr.bf16.mxu0 0
    %405 = vmatpush1.bf16.msra.mxu0 0
    %406 = vmatprep.subr.bf16.mxu0 0
    %407 = vmatpush1.bf16.msra.mxu0 0
    %408 = vmatprep.subr.bf16.mxu0 0
    %409 = vmatpush1.bf16.msra.mxu0 0
    %410 = vmatprep.subr.bf16.mxu0 0
    %411 = vmatpush1.bf16.msra.mxu0 0
    %412 = vmatprep.subr.bf16.mxu0 0
    %413 = vmatpush1.bf16.msra.mxu0 0
    %414 = vmatprep.subr.bf16.mxu0 0
    %415 = vmatpush1.bf16.msra.mxu0 0
    %416 = vmatprep.subr.bf16.mxu0 0
    %417 = vmatpush1.bf16.msra.mxu0 0
    %418 = vmatprep.subr.bf16.mxu0 0
    %419 = vmatpush1.bf16.msra.mxu0 0
    %420 = vmatprep.subr.bf16.mxu0 0
    %421 = vmatpush1.bf16.msra.mxu0 0
    %422 = vmatprep.subr.bf16.mxu0 0
    %423 = vmatpush1.bf16.msra.mxu0 0
    %424 = vmatprep.mubr.bf16.mxu0 0
    %425 = vmatmul.mubr.bf16.gmra.mrb[0].mxu0 %v387
    %v426 = vpop.f32.mrb[0].mxu0
    %v427 = vadd.f32 0.0, %v426
    %v428 = vpop.f32.mrb[0].mxu0
    %v429 = vpop.f32.mrb[0].mxu0
    %v430 = vpop.f32.mrb[0].mxu0
    %431 = vdwg.mxu0
    %v432 = vmul.f32 %v427, %v382
    %434 = vrot.lane.b32.xlu0 %v432, 32
    %v435 = vpop.permute.xlu0 %434
    %vm437 = vcmask 392448
    %438 = vst.msk [vmem:[#allocation2] sm:$0xff] %vm437, %v435
    %439 = vrot.lane.b32.xlu0 %v93, 80
    %v440 = vpop.permute.xlu0 %439
    %441 = vrot.lane.b32.xlu0 %v93, 16
    %v442 = vpop.permute.xlu0 %441
    %v444 = vsel %vm97, %v440, 0
    %v447 = vsel %vm97, %v442, 0
    %449 = vmatprep.subr.bf16.mxu0 0
    %450 = vmatpush1.bf16.xpose.msra.mxu0 %v447
    %451 = vmatprep.subr.bf16.mxu0 0
    %452 = vmatpush1.bf16.xpose.msra.mxu0 0
    %453 = vmatprep.subr.bf16.mxu0 0
    %454 = vmatpush1.bf16.xpose.msra.mxu0 0
    %455 = vmatprep.subr.bf16.mxu0 0
    %456 = vmatpush1.bf16.xpose.msra.mxu0 0
    %457 = vmatprep.subr.bf16.mxu0 0
    %458 = vmatpush1.bf16.xpose.msra.mxu0 0
    %459 = vmatprep.subr.bf16.mxu0 0
    %460 = vmatpush1.bf16.xpose.msra.mxu0 0
    %461 = vmatprep.subr.bf16.mxu0 0
    %462 = vmatpush1.bf16.xpose.msra.mxu0 0
    %463 = vmatprep.subr.bf16.mxu0 0
    %464 = vmatpush1.bf16.xpose.msra.mxu0 0
    %465 = vmatprep.subr.bf16.mxu0 0
    %466 = vmatpush1.bf16.xpose.msra.mxu0 0
    %467 = vmatprep.subr.bf16.mxu0 0
    %468 = vmatpush1.bf16.xpose.msra.mxu0 0
    %469 = vmatprep.subr.bf16.mxu0 0
    %470 = vmatpush1.bf16.xpose.msra.mxu0 0
    %471 = vmatprep.subr.bf16.mxu0 0
    %472 = vmatpush1.bf16.xpose.msra.mxu0 0
    %473 = vmatprep.subr.bf16.mxu0 0
    %474 = vmatpush1.bf16.xpose.msra.mxu0 0
    %475 = vmatprep.subr.bf16.mxu0 0
    %476 = vmatpush1.bf16.xpose.msra.mxu0 0
    %477 = vmatprep.subr.bf16.mxu0 0
    %478 = vmatpush1.bf16.xpose.msra.mxu0 0
    %479 = vmatprep.subr.bf16.mxu0 0
    %480 = vmatpush1.bf16.xpose.msra.mxu0 0
    %481 = vmatprep.mubr.bf16.mxu0 0
    %482 = vmatmul.mubr.bf16.gmra.mrb[0].mxu0 %v444
    %v483 = vpop.f32.mrb[0].mxu0
    %v484 = vadd.f32 0.0, %v483
    %v485 = vpop.f32.mrb[0].mxu0
    %v486 = vpop.f32.mrb[0].mxu0
    %v487 = vpop.f32.mrb[0].mxu0
    %488 = vdwg.mxu0
    %v489 = vsel %vm144, %v484, -inf
    %490 = vmax.xlane.f32.xlu0 %v489
    %v491 = vpop.xlane.xlu0 %490
    %v492 = vsub.f32 %v484, %v491
    %v493 = vmul.f32 %v492, 1.442695
    %v494 = vpow.pop %v493
    %v495 = vsel %vm144, %v494, 0.0
    %496 = vadd.xlane.f32.xlu0 %v495
    %v497 = vpop.xlane.xlu0 %496
    %v498 = vrcp.pop %v497
    %v499 = vpack.c.bf16 %v494, %v494
    %500 = vrot.lane.b32.xlu0 %v156, 80
    %v501 = vpop.permute.xlu0 %500
    %v503 = vsel %vm144, %v499, 0
    %v506 = vsel %vm160, %v501, 0
    %508 = vmatprep.subr.bf16.mxu0 0
    %509 = vmatpush1.bf16.msra.mxu0 %v506
    %510 = vmatprep.subr.bf16.mxu0 0
    %511 = vmatpush1.bf16.msra.mxu0 0
    %512 = vmatprep.subr.bf16.mxu0 0
    %513 = vmatpush1.bf16.msra.mxu0 0
    %514 = vmatprep.subr.bf16.mxu0 0
    %515 = vmatpush1.bf16.msra.mxu0 0
    %516 = vmatprep.subr.bf16.mxu0 0
    %517 = vmatpush1.bf16.msra.mxu0 0
    %518 = vmatprep.subr.bf16.mxu0 0
    %519 = vmatpush1.bf16.msra.mxu0 0
    %520 = vmatprep.subr.bf16.mxu0 0
    %521 = vmatpush1.bf16.msra.mxu0 0
    %522 = vmatprep.subr.bf16.mxu0 0
    %523 = vmatpush1.bf16.msra.mxu0 0
    %524 = vmatprep.subr.bf16.mxu0 0
    %525 = vmatpush1.bf16.msra.mxu0 0
    %526 = vmatprep.subr.bf16.mxu0 0
    %527 = vmatpush1.bf16.msra.mxu0 0
    %528 = vmatprep.subr.bf16.mxu0 0
    %529 = vmatpush1.bf16.msra.mxu0 0
    %530 = vmatprep.subr.bf16.mxu0 0
    %531 = vmatpush1.bf16.msra.mxu0 0
    %532 = vmatprep.subr.bf16.mxu0 0
    %533 = vmatpush1.bf16.msra.mxu0 0
    %534 = vmatprep.subr.bf16.mxu0 0
    %535 = vmatpush1.bf16.msra.mxu0 0
    %536 = vmatprep.subr.bf16.mxu0 0
    %537 = vmatpush1.bf16.msra.mxu0 0
    %538 = vmatprep.subr.bf16.mxu0 0
    %539 = vmatpush1.bf16.msra.mxu0 0
    %540 = vmatprep.mubr.bf16.mxu0 0
    %541 = vmatmul.mubr.bf16.gmra.mrb[0].mxu0 %v503
    %v542 = vpop.f32.mrb[0].mxu0
    %v543 = vadd.f32 0.0, %v542
    %v544 = vpop.f32.mrb[0].mxu0
    %v545 = vpop.f32.mrb[0].mxu0
    %v546 = vpop.f32.mrb[0].mxu0
    %547 = vdwg.mxu0
    %v548 = vmul.f32 %v543, %v498
    %550 = vrot.lane.b32.xlu0 %v548, 48
    %v551 = vpop.permute.xlu0 %550
    %vm553 = vcmask 523648
    %554 = vst.msk [vmem:[#allocation2] sm:$0xff] %vm553, %v551
    %v555 = vpack.c.bf16 %v89, %v89
    %557 = vrot.lane.b32.xlu0 %v555, 64
    %v558 = vpop.permute.xlu0 %557
    %v560 = vsel %vm97, %v555, 0
    %v563 = vsel %vm97, %v558, 0
    %565 = vmatprep.subr.bf16.mxu0 0
    %566 = vmatpush1.bf16.xpose.msra.mxu0 %v563
    %567 = vmatprep.subr.bf16.mxu0 0
    %568 = vmatpush1.bf16.xpose.msra.mxu0 0
    %569 = vmatprep.subr.bf16.mxu0 0
    %570 = vmatpush1.bf16.xpose.msra.mxu0 0
    %571 = vmatprep.subr.bf16.mxu0 0
    %572 = vmatpush1.bf16.xpose.msra.mxu0 0
    %573 = vmatprep.subr.bf16.mxu0 0
    %574 = vmatpush1.bf16.xpose.msra.mxu0 0
    %575 = vmatprep.subr.bf16.mxu0 0
    %576 = vmatpush1.bf16.xpose.msra.mxu0 0
    %577 = vmatprep.subr.bf16.mxu0 0
    %578 = vmatpush1.bf16.xpose.msra.mxu0 0
    %579 = vmatprep.subr.bf16.mxu0 0
    %580 = vmatpush1.bf16.xpose.msra.mxu0 0
    %581 = vmatprep.subr.bf16.mxu0 0
    %582 = vmatpush1.bf16.xpose.msra.mxu0 0
    %583 = vmatprep.subr.bf16.mxu0 0
    %584 = vmatpush1.bf16.xpose.msra.mxu0 0
    %585 = vmatprep.subr.bf16.mxu0 0
    %586 = vmatpush1.bf16.xpose.msra.mxu0 0
    %587 = vmatprep.subr.bf16.mxu0 0
    %588 = vmatpush1.bf16.xpose.msra.mxu0 0
    %589 = vmatprep.subr.bf16.mxu0 0
    %590 = vmatpush1.bf16.xpose.msra.mxu0 0
    %591 = vmatprep.subr.bf16.mxu0 0
    %592 = vmatpush1.bf16.xpose.msra.mxu0 0
    %593 = vmatprep.subr.bf16.mxu0 0
    %594 = vmatpush1.bf16.xpose.msra.mxu0 0
    %595 = vmatprep.subr.bf16.mxu0 0
    %596 = vmatpush1.bf16.xpose.msra.mxu0 0
    %597 = vmatprep.mubr.bf16.mxu0 0
    %598 = vmatmul.mubr.bf16.gmra.mrb[0].mxu0 %v560
    %v599 = vpop.f32.mrb[0].mxu0
    %v600 = vadd.f32 0.0, %v599
    %v601 = vpop.f32.mrb[0].mxu0
    %v602 = vpop.f32.mrb[0].mxu0
    %v603 = vpop.f32.mrb[0].mxu0
    %604 = vdwg.mxu0
    %v605 = vsel %vm144, %v600, -inf
    %606 = vmax.xlane.f32.xlu0 %v605
    %v607 = vpop.xlane.xlu0 %606
    %v608 = vsub.f32 %v600, %v607
    %v609 = vmul.f32 %v608, 1.442695
    %v610 = vpow.pop %v609
    %v611 = vsel %vm144, %v610, 0.0
    %612 = vadd.xlane.f32.xlu0 %v611
    %v613 = vpop.xlane.xlu0 %612
    %v614 = vrcp.pop %v613
    %v615 = vpack.c.bf16 %v610, %v610
    %v616 = vpack.c.bf16 %v91, %v91
    %v618 = vsel %vm144, %v615, 0
    %v621 = vsel %vm160, %v616, 0
    %623 = vmatprep.subr.bf16.mxu0 0
    %624 = vmatpush1.bf16.msra.mxu0 %v621
    %625 = vmatprep.subr.bf16.mxu0 0
    %626 = vmatpush1.bf16.msra.mxu0 0
    %627 = vmatprep.subr.bf16.mxu0 0
    %628 = vmatpush1.bf16.msra.mxu0 0
    %629 = vmatprep.subr.bf16.mxu0 0
    %630 = vmatpush1.bf16.msra.mxu0 0
    %631 = vmatprep.subr.bf16.mxu0 0
    %632 = vmatpush1.bf16.msra.mxu0 0
    %633 = vmatprep.subr.bf16.mxu0 0
    %634 = vmatpush1.bf16.msra.mxu0 0
    %635 = vmatprep.subr.bf16.mxu0 0
    %636 = vmatpush1.bf16.msra.mxu0 0
    %637 = vmatprep.subr.bf16.mxu0 0
    %638 = vmatpush1.bf16.msra.mxu0 0
    %639 = vmatprep.subr.bf16.mxu0 0
    %640 = vmatpush1.bf16.msra.mxu0 0
    %641 = vmatprep.subr.bf16.mxu0 0
    %642 = vmatpush1.bf16.msra.mxu0 0
    %643 = vmatprep.subr.bf16.mxu0 0
    %644 = vmatpush1.bf16.msra.mxu0 0
    %645 = vmatprep.subr.bf16.mxu0 0
    %646 = vmatpush1.bf16.msra.mxu0 0
    %647 = vmatprep.subr.bf16.mxu0 0
    %648 = vmatpush1.bf16.msra.mxu0 0
    %649 = vmatprep.subr.bf16.mxu0 0
    %650 = vmatpush1.bf16.msra.mxu0 0
    %651 = vmatprep.subr.bf16.mxu0 0
    %652 = vmatpush1.bf16.msra.mxu0 0
    %653 = vmatprep.subr.bf16.mxu0 0
    %654 = vmatpush1.bf16.msra.mxu0 0
    %655 = vmatprep.mubr.bf16.mxu0 0
    %656 = vmatmul.mubr.bf16.gmra.mrb[0].mxu0 %v618
    %v657 = vpop.f32.mrb[0].mxu0
    %v658 = vadd.f32 0.0, %v657
    %v659 = vpop.f32.mrb[0].mxu0
    %v660 = vpop.f32.mrb[0].mxu0
    %v661 = vpop.f32.mrb[0].mxu0
    %662 = vdwg.mxu0
    %v663 = vmul.f32 %v658, %v614
    %664 = vst.msk [vmem:[#allocation2 + $0x8] sm:$0xff] %vm97, %v663
    %665 = vrot.lane.b32.xlu0 %v555, 112
    %v666 = vpop.permute.xlu0 %665
    %667 = vrot.lane.b32.xlu0 %v555, 48
    %v668 = vpop.permute.xlu0 %667
    %v670 = vsel %vm97, %v666, 0
    %v673 = vsel %vm97, %v668, 0
    %675 = vmatprep.subr.bf16.mxu0 0
    %676 = vmatpush1.bf16.xpose.msra.mxu0 %v673
    %677 = vmatprep.subr.bf16.mxu0 0
    %678 = vmatpush1.bf16.xpose.msra.mxu0 0
    %679 = vmatprep.subr.bf16.mxu0 0
    %680 = vmatpush1.bf16.xpose.msra.mxu0 0
    %681 = vmatprep.subr.bf16.mxu0 0
    %682 = vmatpush1.bf16.xpose.msra.mxu0 0
    %683 = vmatprep.subr.bf16.mxu0 0
    %684 = vmatpush1.bf16.xpose.msra.mxu0 0
    %685 = vmatprep.subr.bf16.mxu0 0
    %686 = vmatpush1.bf16.xpose.msra.mxu0 0
    %687 = vmatprep.subr.bf16.mxu0 0
    %688 = vmatpush1.bf16.xpose.msra.mxu0 0
    %689 = vmatprep.subr.bf16.mxu0 0
    %690 = vmatpush1.bf16.xpose.msra.mxu0 0
    %691 = vmatprep.subr.bf16.mxu0 0
    %692 = vmatpush1.bf16.xpose.msra.mxu0 0
    %693 = vmatprep.subr.bf16.mxu0 0
    %694 = vmatpush1.bf16.xpose.msra.mxu0 0
    %695 = vmatprep.subr.bf16.mxu0 0
    %696 = vmatpush1.bf16.xpose.msra.mxu0 0
    %697 = vmatprep.subr.bf16.mxu0 0
    %698 = vmatpush1.bf16.xpose.msra.mxu0 0
    %699 = vmatprep.subr.bf16.mxu0 0
    %700 = vmatpush1.bf16.xpose.msra.mxu0 0
    %701 = vmatprep.subr.bf16.mxu0 0
    %702 = vmatpush1.bf16.xpose.msra.mxu0 0
    %703 = vmatprep.subr.bf16.mxu0 0
    %704 = vmatpush1.bf16.xpose.msra.mxu0 0
    %705 = vmatprep.subr.bf16.mxu0 0
    %706 = vmatpush1.bf16.xpose.msra.mxu0 0
    %707 = vmatprep.mubr.bf16.mxu0 0
    %708 = vmatmul.mubr.bf16.gmra.mrb[0].mxu0 %v670
    %v709 = vpop.f32.mrb[0].mxu0
    %v710 = vadd.f32 0.0, %v709
    %v711 = vpop.f32.mrb[0].mxu0
    %v712 = vpop.f32.mrb[0].mxu0
    %v713 = vpop.f32.mrb[0].mxu0
    %714 = vdwg.mxu0
    %v715 = vsel %vm144, %v710, -inf
    %716 = vmax.xlane.f32.xlu0 %v715
    %v717 = vpop.xlane.xlu0 %716
    %v718 = vsub.f32 %v710, %v717
    %v719 = vmul.f32 %v718, 1.442695
    %v720 = vpow.pop %v719
    %v721 = vsel %vm144, %v720, 0.0
    %722 = vadd.xlane.f32.xlu0 %v721
    %v723 = vpop.xlane.xlu0 %722
    %v724 = vrcp.pop %v723
    %v725 = vpack.c.bf16 %v720, %v720
    %727 = vrot.lane.b32.xlu0 %v616, 112
    %v728 = vpop.permute.xlu0 %727
    %v730 = vsel %vm144, %v725, 0
    %v733 = vsel %vm160, %v728, 0
    %735 = vmatprep.subr.bf16.mxu0 0
    %736 = vmatpush1.bf16.msra.mxu0 %v733
    %737 = vmatprep.subr.bf16.mxu0 0
    %738 = vmatpush1.bf16.msra.mxu0 0
    %739 = vmatprep.subr.bf16.mxu0 0
    %740 = vmatpush1.bf16.msra.mxu0 0
    %741 = vmatprep.subr.bf16.mxu0 0
    %742 = vmatpush1.bf16.msra.mxu0 0
    %743 = vmatprep.subr.bf16.mxu0 0
    %744 = vmatpush1.bf16.msra.mxu0 0
    %745 = vmatprep.subr.bf16.mxu0 0
    %746 = vmatpush1.bf16.msra.mxu0 0
    %747 = vmatprep.subr.bf16.mxu0 0
    %748 = vmatpush1.bf16.msra.mxu0 0
    %749 = vmatprep.subr.bf16.mxu0 0
    %750 = vmatpush1.bf16.msra.mxu0 0
    %751 = vmatprep.subr.bf16.mxu0 0
    %752 = vmatpush1.bf16.msra.mxu0 0
    %753 = vmatprep.subr.bf16.mxu0 0
    %754 = vmatpush1.bf16.msra.mxu0 0
    %755 = vmatprep.subr.bf16.mxu0 0
    %756 = vmatpush1.bf16.msra.mxu0 0
    %757 = vmatprep.subr.bf16.mxu0 0
    %758 = vmatpush1.bf16.msra.mxu0 0
    %759 = vmatprep.subr.bf16.mxu0 0
    %760 = vmatpush1.bf16.msra.mxu0 0
    %761 = vmatprep.subr.bf16.mxu0 0
    %762 = vmatpush1.bf16.msra.mxu0 0
    %763 = vmatprep.subr.bf16.mxu0 0
    %764 = vmatpush1.bf16.msra.mxu0 0
    %765 = vmatprep.subr.bf16.mxu0 0
    %766 = vmatpush1.bf16.msra.mxu0 0
    %767 = vmatprep.mubr.bf16.mxu0 0
    %768 = vmatmul.mubr.bf16.gmra.mrb[0].mxu0 %v730
    %v769 = vpop.f32.mrb[0].mxu0
    %v770 = vadd.f32 0.0, %v769
    %v771 = vpop.f32.mrb[0].mxu0
    %v772 = vpop.f32.mrb[0].mxu0
    %v773 = vpop.f32.mrb[0].mxu0
    %774 = vdwg.mxu0
    %v775 = vmul.f32 %v770, %v724
    %777 = vrot.lane.b32.xlu0 %v775, 16
    %v778 = vpop.permute.xlu0 %777
    %780 = vst.msk [vmem:[#allocation2 + $0x8] sm:$0xff] %vm321, %v778
    %781 = vrot.lane.b32.xlu0 %v555, 96
    %v782 = vpop.permute.xlu0 %781
    %783 = vrot.lane.b32.xlu0 %v555, 32
    %v784 = vpop.permute.xlu0 %783
    %v786 = vsel %vm97, %v782, 0
    %v789 = vsel %vm97, %v784, 0
    %791 = vmatprep.subr.bf16.mxu0 0
    %792 = vmatpush1.bf16.xpose.msra.mxu0 %v789
    %793 = vmatprep.subr.bf16.mxu0 0
    %794 = vmatpush1.bf16.xpose.msra.mxu0 0
    %795 = vmatprep.subr.bf16.mxu0 0
    %796 = vmatpush1.bf16.xpose.msra.mxu0 0
    %797 = vmatprep.subr.bf16.mxu0 0
    %798 = vmatpush1.bf16.xpose.msra.mxu0 0
    %799 = vmatprep.subr.bf16.mxu0 0
    %800 = vmatpush1.bf16.xpose.msra.mxu0 0
    %801 = vmatprep.subr.bf16.mxu0 0
    %802 = vmatpush1.bf16.xpose.msra.mxu0 0
    %803 = vmatprep.subr.bf16.mxu0 0
    %804 = vmatpush1.bf16.xpose.msra.mxu0 0
    %805 = vmatprep.subr.bf16.mxu0 0
    %806 = vmatpush1.bf16.xpose.msra.mxu0 0
    %807 = vmatprep.subr.bf16.mxu0 0
    %808 = vmatpush1.bf16.xpose.msra.mxu0 0
    %809 = vmatprep.subr.bf16.mxu0 0
    %810 = vmatpush1.bf16.xpose.msra.mxu0 0
    %811 = vmatprep.subr.bf16.mxu0 0
    %812 = vmatpush1.bf16.xpose.msra.mxu0 0
    %813 = vmatprep.subr.bf16.mxu0 0
    %814 = vmatpush1.bf16.xpose.msra.mxu0 0
    %815 = vmatprep.subr.bf16.mxu0 0
    %816 = vmatpush1.bf16.xpose.msra.mxu0 0
    %817 = vmatprep.subr.bf16.mxu0 0
    %818 = vmatpush1.bf16.xpose.msra.mxu0 0
    %819 = vmatprep.subr.bf16.mxu0 0
    %820 = vmatpush1.bf16.xpose.msra.mxu0 0
    %821 = vmatprep.subr.bf16.mxu0 0
    %822 = vmatpush1.bf16.xpose.msra.mxu0 0
    %823 = vmatprep.mubr.bf16.mxu0 0
    %824 = vmatmul.mubr.bf16.gmra.mrb[0].mxu0 %v786
    %v825 = vpop.f32.mrb[0].mxu0
    %v826 = vadd.f32 0.0, %v825
    %v827 = vpop.f32.mrb[0].mxu0
    %v828 = vpop.f32.mrb[0].mxu0
    %v829 = vpop.f32.mrb[0].mxu0
    %830 = vdwg.mxu0
    %v831 = vsel %vm144, %v826, -inf
    %832 = vmax.xlane.f32.xlu0 %v831
    %v833 = vpop.xlane.xlu0 %832
    %v834 = vsub.f32 %v826, %v833
    %v835 = vmul.f32 %v834, 1.442695
    %v836 = vpow.pop %v835
    %v837 = vsel %vm144, %v836, 0.0
    %838 = vadd.xlane.f32.xlu0 %v837
    %v839 = vpop.xlane.xlu0 %838
    %v840 = vrcp.pop %v839
    %v841 = vpack.c.bf16 %v836, %v836
    %842 = vrot.lane.b32.xlu0 %v616, 96
    %v843 = vpop.permute.xlu0 %842
    %v845 = vsel %vm144, %v841, 0
    %v848 = vsel %vm160, %v843, 0
    %850 = vmatprep.subr.bf16.mxu0 0
    %851 = vmatpush1.bf16.msra.mxu0 %v848
    %852 = vmatprep.subr.bf16.mxu0 0
    %853 = vmatpush1.bf16.msra.mxu0 0
    %854 = vmatprep.subr.bf16.mxu0 0
    %855 = vmatpush1.bf16.msra.mxu0 0
    %856 = vmatprep.subr.bf16.mxu0 0
    %857 = vmatpush1.bf16.msra.mxu0 0
    %858 = vmatprep.subr.bf16.mxu0 0
    %859 = vmatpush1.bf16.msra.mxu0 0
    %860 = vmatprep.subr.bf16.mxu0 0
    %861 = vmatpush1.bf16.msra.mxu0 0
    %862 = vmatprep.subr.bf16.mxu0 0
    %863 = vmatpush1.bf16.msra.mxu0 0
    %864 = vmatprep.subr.bf16.mxu0 0
    %865 = vmatpush1.bf16.msra.mxu0 0
    %866 = vmatprep.subr.bf16.mxu0 0
    %867 = vmatpush1.bf16.msra.mxu0 0
    %868 = vmatprep.subr.bf16.mxu0 0
    %869 = vmatpush1.bf16.msra.mxu0 0
    %870 = vmatprep.subr.bf16.mxu0 0
    %871 = vmatpush1.bf16.msra.mxu0 0
    %872 = vmatprep.subr.bf16.mxu0 0
    %873 = vmatpush1.bf16.msra.mxu0 0
    %874 = vmatprep.subr.bf16.mxu0 0
    %875 = vmatpush1.bf16.msra.mxu0 0
    %876 = vmatprep.subr.bf16.mxu0 0
    %877 = vmatpush1.bf16.msra.mxu0 0
    %878 = vmatprep.subr.bf16.mxu0 0
    %879 = vmatpush1.bf16.msra.mxu0 0
    %880 = vmatprep.subr.bf16.mxu0 0
    %881 = vmatpush1.bf16.msra.mxu0 0
    %882 = vmatprep.mubr.bf16.mxu0 0
    %883 = vmatmul.mubr.bf16.gmra.mrb[0].mxu0 %v845
    %v884 = vpop.f32.mrb[0].mxu0
    %v885 = vadd.f32 0.0, %v884
    %v886 = vpop.f32.mrb[0].mxu0
    %v887 = vpop.f32.mrb[0].mxu0
    %v888 = vpop.f32.mrb[0].mxu0
    %889 = vdwg.mxu0
    %v890 = vmul.f32 %v885, %v840
    %892 = vrot.lane.b32.xlu0 %v890, 32
    %v893 = vpop.permute.xlu0 %892
    %895 = vst.msk [vmem:[#allocation2 + $0x8] sm:$0xff] %vm437, %v893
    %896 = vrot.lane.b32.xlu0 %v555, 80
    %v897 = vpop.permute.xlu0 %896
    %898 = vrot.lane.b32.xlu0 %v555, 16
    %v899 = vpop.permute.xlu0 %898
    %v901 = vsel %vm97, %v897, 0
    %v904 = vsel %vm97, %v899, 0
    %906 = vmatprep.subr.bf16.mxu0 0
    %907 = vmatpush1.bf16.xpose.msra.mxu0 %v904
    %908 = vmatprep.subr.bf16.mxu0 0
    %909 = vmatpush1.bf16.xpose.msra.mxu0 0
    %910 = vmatprep.subr.bf16.mxu0 0
    %911 = vmatpush1.bf16.xpose.msra.mxu0 0
    %912 = vmatprep.subr.bf16.mxu0 0
    %913 = vmatpush1.bf16.xpose.msra.mxu0 0
    %914 = vmatprep.subr.bf16.mxu0 0
    %915 = vmatpush1.bf16.xpose.msra.mxu0 0
    %916 = vmatprep.subr.bf16.mxu0 0
    %917 = vmatpush1.bf16.xpose.msra.mxu0 0
    %918 = vmatprep.subr.bf16.mxu0 0
    %919 = vmatpush1.bf16.xpose.msra.mxu0 0
    %920 = vmatprep.subr.bf16.mxu0 0
    %921 = vmatpush1.bf16.xpose.msra.mxu0 0
    %922 = vmatprep.subr.bf16.mxu0 0
    %923 = vmatpush1.bf16.xpose.msra.mxu0 0
    %924 = vmatprep.subr.bf16.mxu0 0
    %925 = vmatpush1.bf16.xpose.msra.mxu0 0
    %926 = vmatprep.subr.bf16.mxu0 0
    %927 = vmatpush1.bf16.xpose.msra.mxu0 0
    %928 = vmatprep.subr.bf16.mxu0 0
    %929 = vmatpush1.bf16.xpose.msra.mxu0 0
    %930 = vmatprep.subr.bf16.mxu0 0
    %931 = vmatpush1.bf16.xpose.msra.mxu0 0
    %932 = vmatprep.subr.bf16.mxu0 0
    %933 = vmatpush1.bf16.xpose.msra.mxu0 0
    %934 = vmatprep.subr.bf16.mxu0 0
    %935 = vmatpush1.bf16.xpose.msra.mxu0 0
    %936 = vmatprep.subr.bf16.mxu0 0
    %937 = vmatpush1.bf16.xpose.msra.mxu0 0
    %938 = vmatprep.mubr.bf16.mxu0 0
    %939 = vmatmul.mubr.bf16.gmra.mrb[0].mxu0 %v901
    %v940 = vpop.f32.mrb[0].mxu0
    %v941 = vadd.f32 0.0, %v940
    %v942 = vpop.f32.mrb[0].mxu0
    %v943 = vpop.f32.mrb[0].mxu0
    %v944 = vpop.f32.mrb[0].mxu0
    %945 = vdwg.mxu0
    %v946 = vsel %vm144, %v941, -inf
    %947 = vmax.xlane.f32.xlu0 %v946
    %v948 = vpop.xlane.xlu0 %947
    %v949 = vsub.f32 %v941, %v948
    %v950 = vmul.f32 %v949, 1.442695
    %v951 = vpow.pop %v950
    %v952 = vsel %vm144, %v951, 0.0
    %953 = vadd.xlane.f32.xlu0 %v952
    %v954 = vpop.xlane.xlu0 %953
    %v955 = vrcp.pop %v954
    %v956 = vpack.c.bf16 %v951, %v951
    %957 = vrot.lane.b32.xlu0 %v616, 80
    %v958 = vpop.permute.xlu0 %957
    %v960 = vsel %vm144, %v956, 0
    %v963 = vsel %vm160, %v958, 0
    %965 = vmatprep.subr.bf16.mxu0 0
    %966 = vmatpush1.bf16.msra.mxu0 %v963
    %967 = vmatprep.subr.bf16.mxu0 0
    %968 = vmatpush1.bf16.msra.mxu0 0
    %969 = vmatprep.subr.bf16.mxu0 0
    %970 = vmatpush1.bf16.msra.mxu0 0
    %971 = vmatprep.subr.bf16.mxu0 0
    %972 = vmatpush1.bf16.msra.mxu0 0
    %973 = vmatprep.subr.bf16.mxu0 0
    %974 = vmatpush1.bf16.msra.mxu0 0
    %975 = vmatprep.subr.bf16.mxu0 0
    %976 = vmatpush1.bf16.msra.mxu0 0
    %977 = vmatprep.subr.bf16.mxu0 0
    %978 = vmatpush1.bf16.msra.mxu0 0
    %979 = vmatprep.subr.bf16.mxu0 0
    %980 = vmatpush1.bf16.msra.mxu0 0
    %981 = vmatprep.subr.bf16.mxu0 0
    %982 = vmatpush1.bf16.msra.mxu0 0
    %983 = vmatprep.subr.bf16.mxu0 0
    %984 = vmatpush1.bf16.msra.mxu0 0
    %985 = vmatprep.subr.bf16.mxu0 0
    %986 = vmatpush1.bf16.msra.mxu0 0
    %987 = vmatprep.subr.bf16.mxu0 0
    %988 = vmatpush1.bf16.msra.mxu0 0
    %989 = vmatprep.subr.bf16.mxu0 0
    %990 = vmatpush1.bf16.msra.mxu0 0
    %991 = vmatprep.subr.bf16.mxu0 0
    %992 = vmatpush1.bf16.msra.mxu0 0
    %993 = vmatprep.subr.bf16.mxu0 0
    %994 = vmatpush1.bf16.msra.mxu0 0
    %995 = vmatprep.subr.bf16.mxu0 0
    %996 = vmatpush1.bf16.msra.mxu0 0
    %997 = vmatprep.mubr.bf16.mxu0 0
    %998 = vmatmul.mubr.bf16.gmra.mrb[0].mxu0 %v960
    %v999 = vpop.f32.mrb[0].mxu0
    %v1000 = vadd.f32 0.0, %v999
    %v1001 = vpop.f32.mrb[0].mxu0
    %v1002 = vpop.f32.mrb[0].mxu0
    %v1003 = vpop.f32.mrb[0].mxu0
    %1004 = vdwg.mxu0
    %v1005 = vmul.f32 %v1000, %v955
    %1007 = vrot.lane.b32.xlu0 %v1005, 48
    %v1008 = vpop.permute.xlu0 %1007
    %1010 = vst.msk [vmem:[#allocation2 + $0x8] sm:$0xff] %vm553, %v1008
    %v1011 = vld [vmem:[#allocation2] sm:$0xff]
    %v1012 = vld [vmem:[#allocation2 + $0x8] sm:$0xff]
    %v1013 = vpack.c.bf16 %v1012, %v1011
    %v1014 = vld [vmem:[%s2] sm:$0xf]
    %v1015 = vld [vmem:[%s2 + $0x4] sm:$0xf]
    %v1016 = vld [vmem:[%s2 + $0x8] sm:$0xf]
    %v1017 = vld [vmem:[%s2 + $0xc] sm:$0xf]
    %v1018 = vld [vmem:[%s2 + $0x10] sm:$0xf]
    %v1019 = vld [vmem:[%s2 + $0x14] sm:$0xf]
    %v1020 = vld [vmem:[%s2 + $0x18] sm:$0xf]
    %v1021 = vld [vmem:[%s2 + $0x1c] sm:$0xf]
    %v1022 = vld [vmem:[%s3] sm:$0x1]
    %v1024 = vlaneseq
    %v1025 = vshrl.u32 %v1024, 7
    %v1026 = vsub.s32 0, %v1025
    %v1027 = vrot.slane %v1022, %v1026
    %v1037 = vunpack.c.l.b16 %v1014
    %v1038 = vunpack.c.l.b16 %v1015
    %v1039 = vunpack.c.l.b16 %v1016
    %v1040 = vunpack.c.l.b16 %v1017
    %v1041 = vunpack.c.l.b16 %v1018
    %v1042 = vunpack.c.l.b16 %v1019
    %v1043 = vunpack.c.l.b16 %v1020
    %v1044 = vunpack.c.l.b16 %v1021
    %v1045 = vpack.c.b16 %v1038, %v1037
    %v1046 = vpack.c.b16 %v1040, %v1039
    %v1047 = vpack.c.b16 %v1042, %v1041
    %v1048 = vpack.c.b16 %v1044, %v1043
    %vm1053 = vcmask 523264
    %v1055 = vsel %vm1053, %v1013, 0
    %1057 = vmatprep.subr.bf16.mxu0 0
    %1058 = vmatpush1.bf16.msra.mxu0 %v1045
    %1059 = vmatprep.subr.bf16.mxu0 0
    %1060 = vmatpush1.bf16.msra.mxu0 %v1046
    %1061 = vmatprep.subr.bf16.mxu0 0
    %1062 = vmatpush1.bf16.msra.mxu0 %v1047
    %1063 = vmatprep.subr.bf16.mxu0 0
    %1064 = vmatpush1.bf16.msra.mxu0 %v1048
    %1065 = vmatprep.subr.bf16.mxu0 0
    %1066 = vmatpush1.bf16.msra.mxu0 0
    %1067 = vmatprep.subr.bf16.mxu0 0
    %1068 = vmatpush1.bf16.msra.mxu0 0
    %1069 = vmatprep.subr.bf16.mxu0 0
    %1070 = vmatpush1.bf16.msra.mxu0 0
    %1071 = vmatprep.subr.bf16.mxu0 0
    %1072 = vmatpush1.bf16.msra.mxu0 0
    %1073 = vmatprep.subr.bf16.mxu0 0
    %1074 = vmatpush1.bf16.msra.mxu0 0
    %1075 = vmatprep.subr.bf16.mxu0 0
    %1076 = vmatpush1.bf16.msra.mxu0 0
    %1077 = vmatprep.subr.bf16.mxu0 0
    %1078 = vmatpush1.bf16.msra.mxu0 0
    %1079 = vmatprep.subr.bf16.mxu0 0
    %1080 = vmatpush1.bf16.msra.mxu0 0
    %1081 = vmatprep.subr.bf16.mxu0 0
    %1082 = vmatpush1.bf16.msra.mxu0 0
    %1083 = vmatprep.subr.bf16.mxu0 0
    %1084 = vmatpush1.bf16.msra.mxu0 0
    %1085 = vmatprep.subr.bf16.mxu0 0
    %1086 = vmatpush1.bf16.msra.mxu0 0
    %1087 = vmatprep.subr.bf16.mxu0 0
    %1088 = vmatpush1.bf16.msra.mxu0 0
    %1089 = vmatprep.mubr.bf16.mxu0 0
    %1090 = vmatmul.mubr.bf16.gmra.mrb[0].mxu0 %v1055
    %v1091 = vpop.f32.mrb[0].mxu0
    %v1092 = vadd.f32 %v1027, %v1091
    %v1093 = vpop.f32.mrb[0].mxu0
    %v1094 = vpop.f32.mrb[0].mxu0
    %v1095 = vadd.f32 %v1027, %v1094
    %v1096 = vpop.f32.mrb[0].mxu0
    %1097 = vdwg.mxu0
    %v1098 = vadd.f32 %v1092, %v19
    %v1099 = vadd.f32 %v1095, %v20
    %1100 = vst.msk [vmem:[#allocation3] sm:$0xff] %vm46, %v1098
    %1101 = vst.msk [vmem:[#allocation3 + $0x8] sm:$0xff] %vm46, %v1099
    // Predicated region
    $region18: #{tpu_custom_call.1} parent=1 // pred_check
      _
    $region19: #{tpu_custom_call.1} parent=1 // pred_check_branch
      %1103 = sbr.rel (0) target = $region21
    $region20: #{tpu_custom_call.1} parent=1 // pred_region
      %s1105 = ssub.s32 256, 256
      %1106 = vsyncadd [#allocation4], %s1105
      %s1107 = sshll.u32 [#allocation3], 4
      %s1108 = int_to_ptr.vmem [resolvable:$true] %s1107
      %1113 = dma.vmem_to_hbm [thread:$0]  %s1108, 256, %s4, [#allocation4], 128, 128, 8
    $region21: #{tpu_custom_call.1} parent=1 // pred_fallthru
      _
    // Predicated region
    $region22: #{tpu_custom_call.1} parent=1 // pred_check
      _
    $region23: #{tpu_custom_call.1} parent=1 // pred_check_branch
      %1115 = sbr.rel (0) target = $region25
    $region24: #{tpu_custom_call.1} parent=1 // pred_region
      %1116 = dma.done [#allocation4], 256
    $region25: #{tpu_custom_call.1} parent=1 // pred_fallthru
      _
    %1117 = vsyncpa [#allocation4], 1

</llo_original>
